<compile_context>
chip_gen: v6e
topology: v6e:2x2x1
jax: 0.10.0
libtpu: 0.0.40
codegen_flags: <defaults>
</compile_context>

<pallas_src>
import math

import jax
import jax.numpy as jnp
import numpy as np
from jax import lax
from jax.experimental import pallas as pl
from jax.experimental.pallas import tpu as pltpu


LN_EPS = 1e-5

# Row indices inside the packed (8, 3*D) vector table.
_BQKV, _BO, _G1, _B1, _G2, _B2, _BF2, _BF1 = range(8)


def _layernorm(x, gamma, beta):
    mean = jnp.mean(x, axis=-1, keepdims=True)
    var = jnp.mean((x - mean) ** 2, axis=-1, keepdims=True)
    return (x - mean) * lax.rsqrt(var + LN_EPS) * gamma + beta


def _make_encoder_kernel(seqs_per_tile, seq, m_dim, n_heads):
    T, S, D, H = seqs_per_tile, seq, m_dim, n_heads
    hd = D // H
    bf16 = jnp.bfloat16

    def split_heads(a):
        # (T*S, D) -> (H*T, S, hd); only lane slices + leading-dim reshapes +
        # leading-axis concat (all cheap / guaranteed to lower on Mosaic).
        parts = [a[:, h * hd:(h + 1) * hd].reshape(T, S, hd) for h in range(H)]
        return jnp.concatenate(parts, axis=0)

    def merge_heads(ctx):
        # (H*T, S, hd) -> (T*S, H*hd) = (T*S, D); head-major lane order
        # matches the PyTorch torch.cat([...], dim=-1) layout that Wo expects.
        parts = [ctx[h * T:(h + 1) * T].reshape(T * S, hd) for h in range(H)]
        return jnp.concatenate(parts, axis=-1)

    def kernel(x_ref, wqkv_ref, wo_ref, wf1_ref, wf2_ref, vec_ref, out_ref):
        x = x_ref[...]                           # (T*S, D)   f32
        vecs = vec_ref[...]                      # (8, 3D)    f32

        # ---- fused QKV projection (one D-wide matmul) + ONE fused bias add.
        # The 1/sqrt(hd) softmax scale is already folded into the Q columns.
        qkv = jnp.dot(x.astype(bf16), wqkv_ref[...],
                      preferred_element_type=jnp.float32)        # (T*S, 3D)
        qkv = qkv + vecs[_BQKV:_BQKV + 1, :]

        # ---- batched attention over all (sequence, head) pairs at once ----
        qh = split_heads(qkv[:, 0 * D:1 * D])                    # (H*T, S, hd)
        kh = split_heads(qkv[:, 1 * D:2 * D])
        vh = split_heads(qkv[:, 2 * D:3 * D])

        s = jnp.einsum('bqd,bkd->bqk', qh, kh,
                       preferred_element_type=jnp.float32)       # (H*T, S, S)
        s = s - jnp.max(s, axis=-1, keepdims=True)
        p = jnp.exp(s)
        p = p * pl.reciprocal(jnp.sum(p, axis=-1, keepdims=True), approx=True)
        ctx = jnp.einsum('bqk,bkd->bqd', p, vh,
                         preferred_element_type=jnp.float32)     # (H*T, S, hd)

        # ---- merge heads (register value, no VMEM round trip) + Wo + LN1 ----
        attn = merge_heads(ctx)                                  # (T*S, D)
        proj = jnp.dot(attn.astype(bf16), wo_ref[...],
                       preferred_element_type=jnp.float32)
        proj = proj + vecs[_BO:_BO + 1, :D]
        out1 = _layernorm(proj + x, vecs[_G1:_G1 + 1, :D],
                          vecs[_B1:_B1 + 1, :D])
        # dropout(p=0.1) -> identity in eval mode

        # ---- FFN (D -> 2D -> D, ReLU) + residual + LayerNorm2 ----
        hidden = jnp.dot(out1.astype(bf16), wf1_ref[...],
                         preferred_element_type=jnp.float32)
        hidden = jnp.maximum(hidden + vecs[_BF1:_BF1 + 1, :2 * D], 0.0)
        ffn = jnp.dot(hidden.astype(bf16), wf2_ref[...],
                      preferred_element_type=jnp.float32)
        ffn = ffn + vecs[_BF2:_BF2 + 1, :D]
        out2 = _layernorm(out1 + ffn, vecs[_G2:_G2 + 1, :D],
                          vecs[_B2:_B2 + 1, :D])
        out_ref[...] = out2.astype(out_ref.dtype)

    return kernel


def _pack_params(p, scale):
    """Pack per-head / per-layer params into a few lane-dense arrays."""
    H, D, hd = p["wq"].shape

    def stack_heads(w):  # (H, D, hd) -> (D, H*hd), head-major lane order
        return jnp.transpose(w, (1, 0, 2)).reshape(D, H * hd)

    # Fold the softmax scale into Q weights / bias at pack time.
    wqkv = jnp.concatenate(
        [stack_heads(p["wq"]) * scale, stack_heads(p["wk"]),
         stack_heads(p["wv"])], axis=1)                          # (D, 3D)
    bqkv = jnp.concatenate(
        [p["bq"].reshape(-1) * scale, p["bk"].reshape(-1),
         p["bv"].reshape(-1)])                                   # (3D,)

    vecs = jnp.zeros((8, 3 * D), jnp.float32)
    vecs = vecs.at[_BQKV, :].set(bqkv)
    vecs = vecs.at[_BO, :D].set(p["bo"])
    vecs = vecs.at[_G1, :D].set(p["g1"])
    vecs = vecs.at[_B1, :D].set(p["b1"])
    vecs = vecs.at[_G2, :D].set(p["g2"])
    vecs = vecs.at[_B2, :D].set(p["b2"])
    vecs = vecs.at[_BF2, :D].set(p["bf2"])
    vecs = vecs.at[_BF1, :2 * D].set(p["bf1"])

    bf16 = jnp.bfloat16
    return (wqkv.astype(bf16), p["wo"].astype(bf16),
            p["wf1"].astype(bf16), p["wf2"].astype(bf16), vecs)


def encoder_forward(x, params, *, seqs_per_tile=None):
    B, S, D = x.shape
    H = params["bq"].shape[0]
    hd = D // H
    scale = 1.0 / math.sqrt(hd)

    if seqs_per_tile is None:
        # Prefer 2 parallel whole-sequence row tiles (v7x megacore) when they
        # stay sublane-aligned; otherwise fall back to one tile per call.
        cand = max(1, B // 2)
        if B % cand == 0 and (cand * S) % 8 == 0:
            seqs_per_tile = cand
        else:
            seqs_per_tile = B
    rows = seqs_per_tile * S
    grid = (B // seqs_per_tile,)

    wqkv, wo, wf1, wf2, vecs = _pack_params(params, scale)
    x2d = x.reshape(B * S, D)          # layout-trivial host-side flatten

    kernel = _make_encoder_kernel(seqs_per_tile, S, D, H)

    out2d = pl.pallas_call(
        kernel,
        out_shape=jax.ShapeDtypeStruct((B * S, D), jnp.float32),
        grid=grid,
        in_specs=[
            pl.BlockSpec((rows, D), lambda i: (i, 0)),       # x row tiles
            pl.BlockSpec(wqkv.shape, lambda i: (0, 0)),      # resident weights
            pl.BlockSpec(wo.shape, lambda i: (0, 0)),
            pl.BlockSpec(wf1.shape, lambda i: (0, 0)),
            pl.BlockSpec(wf2.shape, lambda i: (0, 0)),
            pl.BlockSpec(vecs.shape, lambda i: (0, 0)),
        ],
        out_specs=pl.BlockSpec((rows, D), lambda i: (i, 0)),
        compiler_params=pltpu.CompilerParams(
            dimension_semantics=("parallel",)),
    )(x2d, wqkv, wo, wf1, wf2, vecs)
    return out2d.reshape(B, S, D)


def encoder_reference(x, p):
    """Pure-JAX f32 reference mirroring the PyTorch Encoder.forward (eval)."""
    H, D, hd = p["wq"].shape

    def ln(z, g, b):
        m = z.mean(-1, keepdims=True)
        v = ((z - m) ** 2).mean(-1, keepdims=True)
        return (z - m) / jnp.sqrt(v + LN_EPS) * g + b

    def head(h):
        q = x @ p["wq"][h] + p["bq"][h]
        k = x @ p["wk"][h] + p["bk"][h]
        v = x @ p["wv"][h] + p["bv"][h]
        s = jnp.einsum("bqh,bkh->bqk", q, k) / math.sqrt(hd)
        pr = jax.nn.softmax(s, axis=-1)
        return jnp.einsum("bqk,bkh->bqh", pr, v)

    a = jnp.concatenate([head(h) for h in range(H)], axis=-1)
    proj = a @ p["wo"] + p["bo"]
    out1 = ln(proj + x, p["g1"], p["b1"])
    f = jax.nn.relu(out1 @ p["wf1"] + p["bf1"])
    f = f @ p["wf2"] + p["bf2"]
    return ln(out1 + f, p["g2"], p["b2"])


def make_params(key, m_dim, n_heads):
    hd = m_dim // n_heads
    keys = iter(jax.random.split(key, 16))

    def rnd(shape, scale=0.1):
        return (scale * jax.random.normal(next(keys), shape)).astype(jnp.float32)

    p = {}
    for nm in ("q", "k", "v"):                 # per-head projections (stacked)
        p[f"w{nm}"] = rnd((n_heads, m_dim, hd))
        p[f"b{nm}"] = rnd((n_heads, hd))
    p["wo"] = rnd((m_dim, m_dim))              # (H*hd, D), right-multiply form
    p["bo"] = rnd((m_dim,))
    p["g1"] = jnp.ones((m_dim,), jnp.float32)
    p["b1"] = jnp.zeros((m_dim,), jnp.float32)
    p["wf1"] = rnd((m_dim, 2 * m_dim))
    p["bf1"] = rnd((2 * m_dim,))
    p["wf2"] = rnd((2 * m_dim, m_dim))
    p["bf2"] = rnd((m_dim,))
    p["g2"] = jnp.ones((m_dim,), jnp.float32)
    p["b2"] = jnp.zeros((m_dim,), jnp.float32)
    return p


if __name__ == "__main__":
    B, S, M_DIM, N_HEADS = 2, 8, 32, 4

    key = jax.random.PRNGKey(0)
    k_params, k_x = jax.random.split(key)
    params = make_params(k_params, M_DIM, N_HEADS)
    x = (0.5 * jax.random.normal(k_x, (B, S, M_DIM))).astype(jnp.float32)

    out = encoder_forward(x, params)
    out = jax.block_until_ready(out)

    ref = encoder_reference(x, params)
    # Kernel uses bf16 MXU operands (f32 accumulate) + approx reciprocal,
    # reference is pure f32 -> allow ~1e-2-level tolerance.
    np.testing.assert_allclose(np.asarray(out), np.asarray(ref),
                               atol=2e-2, rtol=2e-2)
    print("KERNEL_OK")
</pallas_src>

<mosaic_0001>
module attributes {stable_mosaic.version = 11 : i64} {
  func.func @kernel(%arg0: i32, %arg1: memref<8x32xf32, #tpu.memory_space<vmem>>, %arg2: memref<32x96xbf16, #tpu.memory_space<vmem>>, %arg3: memref<32x32xbf16, #tpu.memory_space<vmem>>, %arg4: memref<32x64xbf16, #tpu.memory_space<vmem>>, %arg5: memref<64x32xbf16, #tpu.memory_space<vmem>>, %arg6: memref<8x96xf32, #tpu.memory_space<vmem>>, %arg7: memref<8x32xf32, #tpu.memory_space<vmem>>) attributes {dimension_semantics = [#tpu.dimension_semantics<parallel>], iteration_bounds = array<i64: 2>, scalar_prefetch = 0 : i64, scratch_operands = 0 : i64, tpu.core_type = #tpu.core_type<tc>, window_params = [{transform_indices = @transform_0, window_bounds = array<i64: 8, 32>}, {pipeline_mode = #tpu.pipeline_mode<synchronous>, transform_indices = @transform_1, window_bounds = array<i64: 32, 96>}, {pipeline_mode = #tpu.pipeline_mode<synchronous>, transform_indices = @transform_2, window_bounds = array<i64: 32, 32>}, {pipeline_mode = #tpu.pipeline_mode<synchronous>, transform_indices = @transform_3, window_bounds = array<i64: 32, 64>}, {pipeline_mode = #tpu.pipeline_mode<synchronous>, transform_indices = @transform_4, window_bounds = array<i64: 64, 32>}, {pipeline_mode = #tpu.pipeline_mode<synchronous>, transform_indices = @transform_5, window_bounds = array<i64: 8, 96>}, {transform_indices = @transform_6, window_bounds = array<i64: 8, 32>}]} {
    %c0 = arith.constant 0 : index
    %c0_0 = arith.constant 0 : index
    %0 = vector.load %arg1[%c0, %c0_0] : memref<8x32xf32, #tpu.memory_space<vmem>>, vector<8x32xf32>
    %c0_1 = arith.constant 0 : index
    %c0_2 = arith.constant 0 : index
    %1 = vector.load %arg6[%c0_1, %c0_2] : memref<8x96xf32, #tpu.memory_space<vmem>>, vector<8x96xf32>
    %2 = arith.truncf %0 : vector<8x32xf32> to vector<8x32xbf16>
    %c0_3 = arith.constant 0 : index
    %c0_4 = arith.constant 0 : index
    %3 = vector.load %arg2[%c0_3, %c0_4] : memref<32x96xbf16, #tpu.memory_space<vmem>>, vector<32x96xbf16>
    %cst = arith.constant dense<0.000000e+00> : vector<8x96xf32>
    %4 = tpu.matmul %2, %3, %cst {dimension_numbers = #tpu.dot_dimension_numbers<[1], [0], [0], [1], [0, 0, 1, 1], [], []>} : vector<8x32xbf16>, vector<32x96xbf16>, vector<8x96xf32> -> vector<8x96xf32>
    %5 = vector.extract_strided_slice %1 {offsets = [0, 0], sizes = [1, 96], strides = [1, 1]} : vector<8x96xf32> to vector<1x96xf32>
    %6 = vector.broadcast %5 : vector<1x96xf32> to vector<8x96xf32>
    %7 = arith.addf %4, %6 : vector<8x96xf32>
    %8 = vector.extract_strided_slice %7 {offsets = [0, 0], sizes = [8, 32], strides = [1, 1]} : vector<8x96xf32> to vector<8x32xf32>
    %9 = vector.extract_strided_slice %8 {offsets = [0, 0], sizes = [8, 8], strides = [1, 1]} : vector<8x32xf32> to vector<8x8xf32>
    %10 = vector.shape_cast %9 : vector<8x8xf32> to vector<1x8x8xf32>
    %11 = vector.extract_strided_slice %8 {offsets = [0, 8], sizes = [8, 8], strides = [1, 1]} : vector<8x32xf32> to vector<8x8xf32>
    %12 = vector.shape_cast %11 : vector<8x8xf32> to vector<1x8x8xf32>
    %13 = vector.extract_strided_slice %8 {offsets = [0, 16], sizes = [8, 8], strides = [1, 1]} : vector<8x32xf32> to vector<8x8xf32>
    %14 = vector.shape_cast %13 : vector<8x8xf32> to vector<1x8x8xf32>
    %15 = vector.extract_strided_slice %8 {offsets = [0, 24], sizes = [8, 8], strides = [1, 1]} : vector<8x32xf32> to vector<8x8xf32>
    %16 = vector.shape_cast %15 : vector<8x8xf32> to vector<1x8x8xf32>
    %17 = tpu.concatenate %10, %12, %14, %16 in 0 : vector<1x8x8xf32>, vector<1x8x8xf32>, vector<1x8x8xf32>, vector<1x8x8xf32> -> vector<4x8x8xf32>
    %18 = vector.extract_strided_slice %7 {offsets = [0, 32], sizes = [8, 32], strides = [1, 1]} : vector<8x96xf32> to vector<8x32xf32>
    %19 = vector.extract_strided_slice %18 {offsets = [0, 0], sizes = [8, 8], strides = [1, 1]} : vector<8x32xf32> to vector<8x8xf32>
    %20 = vector.shape_cast %19 : vector<8x8xf32> to vector<1x8x8xf32>
    %21 = vector.extract_strided_slice %18 {offsets = [0, 8], sizes = [8, 8], strides = [1, 1]} : vector<8x32xf32> to vector<8x8xf32>
    %22 = vector.shape_cast %21 : vector<8x8xf32> to vector<1x8x8xf32>
    %23 = vector.extract_strided_slice %18 {offsets = [0, 16], sizes = [8, 8], strides = [1, 1]} : vector<8x32xf32> to vector<8x8xf32>
    %24 = vector.shape_cast %23 : vector<8x8xf32> to vector<1x8x8xf32>
    %25 = vector.extract_strided_slice %18 {offsets = [0, 24], sizes = [8, 8], strides = [1, 1]} : vector<8x32xf32> to vector<8x8xf32>
    %26 = vector.shape_cast %25 : vector<8x8xf32> to vector<1x8x8xf32>
    %27 = tpu.concatenate %20, %22, %24, %26 in 0 : vector<1x8x8xf32>, vector<1x8x8xf32>, vector<1x8x8xf32>, vector<1x8x8xf32> -> vector<4x8x8xf32>
    %28 = vector.extract_strided_slice %7 {offsets = [0, 64], sizes = [8, 32], strides = [1, 1]} : vector<8x96xf32> to vector<8x32xf32>
    %29 = vector.extract_strided_slice %28 {offsets = [0, 0], sizes = [8, 8], strides = [1, 1]} : vector<8x32xf32> to vector<8x8xf32>
    %30 = vector.shape_cast %29 : vector<8x8xf32> to vector<1x8x8xf32>
    %31 = vector.extract_strided_slice %28 {offsets = [0, 8], sizes = [8, 8], strides = [1, 1]} : vector<8x32xf32> to vector<8x8xf32>
    %32 = vector.shape_cast %31 : vector<8x8xf32> to vector<1x8x8xf32>
    %33 = vector.extract_strided_slice %28 {offsets = [0, 16], sizes = [8, 8], strides = [1, 1]} : vector<8x32xf32> to vector<8x8xf32>
    %34 = vector.shape_cast %33 : vector<8x8xf32> to vector<1x8x8xf32>
    %35 = vector.extract_strided_slice %28 {offsets = [0, 24], sizes = [8, 8], strides = [1, 1]} : vector<8x32xf32> to vector<8x8xf32>
    %36 = vector.shape_cast %35 : vector<8x8xf32> to vector<1x8x8xf32>
    %37 = tpu.concatenate %30, %32, %34, %36 in 0 : vector<1x8x8xf32>, vector<1x8x8xf32>, vector<1x8x8xf32>, vector<1x8x8xf32> -> vector<4x8x8xf32>
    "tpu.trace_start"() <{level = 10 : i32, message = "bqd,bkd->bqk"}> : () -> ()
    %cst_5 = arith.constant dense<0.000000e+00> : vector<4x8x8xf32>
    %38 = tpu.matmul %17, %27, %cst_5 {dimension_numbers = #tpu.dot_dimension_numbers<[2], [2], [1], [1], [0, 0, 0, 1, 1, 1], [0], [0]>} : vector<4x8x8xf32>, vector<4x8x8xf32>, vector<4x8x8xf32> -> vector<4x8x8xf32>
    "tpu.trace_stop"() : () -> ()
    %cst_6 = arith.constant dense<0xFF800000> : vector<4x8xf32>
    %39 = vector.multi_reduction <maximumf>, %38, %cst_6 [2] : vector<4x8x8xf32> to vector<4x8xf32>
    %40 = vector.shape_cast %39 : vector<4x8xf32> to vector<4x8x1xf32>
    %41 = vector.broadcast %40 : vector<4x8x1xf32> to vector<4x8x8xf32>
    %42 = arith.subf %38, %41 : vector<4x8x8xf32>
    %43 = math.exp %42 : vector<4x8x8xf32>
    %cst_7 = arith.constant dense<0.000000e+00> : vector<4x8xf32>
    %44 = vector.multi_reduction <add>, %43, %cst_7 [2] : vector<4x8x8xf32> to vector<4x8xf32>
    %45 = vector.shape_cast %44 : vector<4x8xf32> to vector<4x8x1xf32>
    %46 = tpu.reciprocal %45 {approx = true} : vector<4x8x1xf32> -> vector<4x8x1xf32>
    %47 = vector.broadcast %46 : vector<4x8x1xf32> to vector<4x8x8xf32>
    %48 = arith.mulf %43, %47 : vector<4x8x8xf32>
    "tpu.trace_start"() <{level = 10 : i32, message = "bqk,bkd->bqd"}> : () -> ()
    %cst_8 = arith.constant dense<0.000000e+00> : vector<4x8x8xf32>
    %49 = tpu.matmul %48, %37, %cst_8 {dimension_numbers = #tpu.dot_dimension_numbers<[2], [1], [1], [2], [0, 0, 0, 1, 1, 2], [0], [0]>} : vector<4x8x8xf32>, vector<4x8x8xf32>, vector<4x8x8xf32> -> vector<4x8x8xf32>
    "tpu.trace_stop"() : () -> ()
    %50 = vector.extract_strided_slice %49 {offsets = [0, 0, 0], sizes = [1, 8, 8], strides = [1, 1, 1]} : vector<4x8x8xf32> to vector<1x8x8xf32>
    %51 = vector.shape_cast %50 : vector<1x8x8xf32> to vector<8x8xf32>
    %52 = vector.extract_strided_slice %49 {offsets = [1, 0, 0], sizes = [1, 8, 8], strides = [1, 1, 1]} : vector<4x8x8xf32> to vector<1x8x8xf32>
    %53 = vector.shape_cast %52 : vector<1x8x8xf32> to vector<8x8xf32>
    %54 = vector.extract_strided_slice %49 {offsets = [2, 0, 0], sizes = [1, 8, 8], strides = [1, 1, 1]} : vector<4x8x8xf32> to vector<1x8x8xf32>
    %55 = vector.shape_cast %54 : vector<1x8x8xf32> to vector<8x8xf32>
    %56 = vector.extract_strided_slice %49 {offsets = [3, 0, 0], sizes = [1, 8, 8], strides = [1, 1, 1]} : vector<4x8x8xf32> to vector<1x8x8xf32>
    %57 = vector.shape_cast %56 : vector<1x8x8xf32> to vector<8x8xf32>
    %58 = tpu.concatenate %51, %53, %55, %57 in 1 : vector<8x8xf32>, vector<8x8xf32>, vector<8x8xf32>, vector<8x8xf32> -> vector<8x32xf32>
    %59 = arith.truncf %58 : vector<8x32xf32> to vector<8x32xbf16>
    %c0_9 = arith.constant 0 : index
    %c0_10 = arith.constant 0 : index
    %60 = vector.load %arg3[%c0_9, %c0_10] : memref<32x32xbf16, #tpu.memory_space<vmem>>, vector<32x32xbf16>
    %cst_11 = arith.constant dense<0.000000e+00> : vector<8x32xf32>
    %61 = tpu.matmul %59, %60, %cst_11 {dimension_numbers = #tpu.dot_dimension_numbers<[1], [0], [0], [1], [0, 0, 1, 1], [], []>} : vector<8x32xbf16>, vector<32x32xbf16>, vector<8x32xf32> -> vector<8x32xf32>
    %62 = vector.extract_strided_slice %1 {offsets = [1, 0], sizes = [1, 32], strides = [1, 1]} : vector<8x96xf32> to vector<1x32xf32>
    %63 = vector.broadcast %62 : vector<1x32xf32> to vector<8x32xf32>
    %64 = arith.addf %61, %63 : vector<8x32xf32>
    %65 = arith.addf %64, %0 : vector<8x32xf32>
    %66 = vector.extract_strided_slice %1 {offsets = [2, 0], sizes = [1, 32], strides = [1, 1]} : vector<8x96xf32> to vector<1x32xf32>
    %67 = vector.extract_strided_slice %1 {offsets = [3, 0], sizes = [1, 32], strides = [1, 1]} : vector<8x96xf32> to vector<1x32xf32>
    %cst_12 = arith.constant dense<0.000000e+00> : vector<8xf32>
    %68 = vector.multi_reduction <add>, %65, %cst_12 [1] : vector<8x32xf32> to vector<8xf32>
    %69 = vector.shape_cast %68 : vector<8xf32> to vector<8x1xf32>
    %cst_13 = arith.constant 3.200000e+01 : f32
    %70 = vector.broadcast %cst_13 : f32 to vector<8x1xf32>
    %71 = arith.divf %69, %70 : vector<8x1xf32>
    %72 = vector.broadcast %71 : vector<8x1xf32> to vector<8x32xf32>
    %73 = arith.subf %65, %72 : vector<8x32xf32>
    %74 = arith.mulf %73, %73 : vector<8x32xf32>
    %cst_14 = arith.constant dense<0.000000e+00> : vector<8xf32>
    %75 = vector.multi_reduction <add>, %74, %cst_14 [1] : vector<8x32xf32> to vector<8xf32>
    %76 = vector.shape_cast %75 : vector<8xf32> to vector<8x1xf32>
    %cst_15 = arith.constant 3.200000e+01 : f32
    %77 = vector.broadcast %cst_15 : f32 to vector<8x1xf32>
    %78 = arith.divf %76, %77 : vector<8x1xf32>
    %79 = vector.broadcast %71 : vector<8x1xf32> to vector<8x32xf32>
    %80 = arith.subf %65, %79 : vector<8x32xf32>
    %cst_16 = arith.constant 9.99999974E-6 : f32
    %81 = vector.broadcast %cst_16 : f32 to vector<8x1xf32>
    %82 = arith.addf %78, %81 : vector<8x1xf32>
    %83 = math.rsqrt %82 : vector<8x1xf32>
    %84 = vector.broadcast %83 : vector<8x1xf32> to vector<8x32xf32>
    %85 = arith.mulf %80, %84 : vector<8x32xf32>
    %86 = vector.broadcast %66 : vector<1x32xf32> to vector<8x32xf32>
    %87 = arith.mulf %85, %86 : vector<8x32xf32>
    %88 = vector.broadcast %67 : vector<1x32xf32> to vector<8x32xf32>
    %89 = arith.addf %87, %88 : vector<8x32xf32>
    %90 = arith.truncf %89 : vector<8x32xf32> to vector<8x32xbf16>
    %c0_17 = arith.constant 0 : index
    %c0_18 = arith.constant 0 : index
    %91 = vector.load %arg4[%c0_17, %c0_18] : memref<32x64xbf16, #tpu.memory_space<vmem>>, vector<32x64xbf16>
    %cst_19 = arith.constant dense<0.000000e+00> : vector<8x64xf32>
    %92 = tpu.matmul %90, %91, %cst_19 {dimension_numbers = #tpu.dot_dimension_numbers<[1], [0], [0], [1], [0, 0, 1, 1], [], []>} : vector<8x32xbf16>, vector<32x64xbf16>, vector<8x64xf32> -> vector<8x64xf32>
    %93 = vector.extract_strided_slice %1 {offsets = [7, 0], sizes = [1, 64], strides = [1, 1]} : vector<8x96xf32> to vector<1x64xf32>
    %94 = vector.broadcast %93 : vector<1x64xf32> to vector<8x64xf32>
    %95 = arith.addf %92, %94 : vector<8x64xf32>
    %cst_20 = arith.constant 0.000000e+00 : f32
    %96 = vector.broadcast %cst_20 : f32 to vector<8x64xf32>
    %97 = arith.maximumf %95, %96 : vector<8x64xf32>
    %98 = arith.truncf %97 : vector<8x64xf32> to vector<8x64xbf16>
    %c0_21 = arith.constant 0 : index
    %c0_22 = arith.constant 0 : index
    %99 = vector.load %arg5[%c0_21, %c0_22] : memref<64x32xbf16, #tpu.memory_space<vmem>>, vector<64x32xbf16>
    %cst_23 = arith.constant dense<0.000000e+00> : vector<8x32xf32>
    %100 = tpu.matmul %98, %99, %cst_23 {dimension_numbers = #tpu.dot_dimension_numbers<[1], [0], [0], [1], [0, 0, 1, 1], [], []>} : vector<8x64xbf16>, vector<64x32xbf16>, vector<8x32xf32> -> vector<8x32xf32>
    %101 = vector.extract_strided_slice %1 {offsets = [6, 0], sizes = [1, 32], strides = [1, 1]} : vector<8x96xf32> to vector<1x32xf32>
    %102 = vector.broadcast %101 : vector<1x32xf32> to vector<8x32xf32>
    %103 = arith.addf %100, %102 : vector<8x32xf32>
    %104 = arith.addf %89, %103 : vector<8x32xf32>
    %105 = vector.extract_strided_slice %1 {offsets = [4, 0], sizes = [1, 32], strides = [1, 1]} : vector<8x96xf32> to vector<1x32xf32>
    %106 = vector.extract_strided_slice %1 {offsets = [5, 0], sizes = [1, 32], strides = [1, 1]} : vector<8x96xf32> to vector<1x32xf32>
    %cst_24 = arith.constant dense<0.000000e+00> : vector<8xf32>
    %107 = vector.multi_reduction <add>, %104, %cst_24 [1] : vector<8x32xf32> to vector<8xf32>
    %108 = vector.shape_cast %107 : vector<8xf32> to vector<8x1xf32>
    %cst_25 = arith.constant 3.200000e+01 : f32
    %109 = vector.broadcast %cst_25 : f32 to vector<8x1xf32>
    %110 = arith.divf %108, %109 : vector<8x1xf32>
    %111 = vector.broadcast %110 : vector<8x1xf32> to vector<8x32xf32>
    %112 = arith.subf %104, %111 : vector<8x32xf32>
    %113 = arith.mulf %112, %112 : vector<8x32xf32>
    %cst_26 = arith.constant dense<0.000000e+00> : vector<8xf32>
    %114 = vector.multi_reduction <add>, %113, %cst_26 [1] : vector<8x32xf32> to vector<8xf32>
    %115 = vector.shape_cast %114 : vector<8xf32> to vector<8x1xf32>
    %cst_27 = arith.constant 3.200000e+01 : f32
    %116 = vector.broadcast %cst_27 : f32 to vector<8x1xf32>
    %117 = arith.divf %115, %116 : vector<8x1xf32>
    %118 = vector.broadcast %110 : vector<8x1xf32> to vector<8x32xf32>
    %119 = arith.subf %104, %118 : vector<8x32xf32>
    %cst_28 = arith.constant 9.99999974E-6 : f32
    %120 = vector.broadcast %cst_28 : f32 to vector<8x1xf32>
    %121 = arith.addf %117, %120 : vector<8x1xf32>
    %122 = math.rsqrt %121 : vector<8x1xf32>
    %123 = vector.broadcast %122 : vector<8x1xf32> to vector<8x32xf32>
    %124 = arith.mulf %119, %123 : vector<8x32xf32>
    %125 = vector.broadcast %105 : vector<1x32xf32> to vector<8x32xf32>
    %126 = arith.mulf %124, %125 : vector<8x32xf32>
    %127 = vector.broadcast %106 : vector<1x32xf32> to vector<8x32xf32>
    %128 = arith.addf %126, %127 : vector<8x32xf32>
    %c0_29 = arith.constant 0 : index
    %c0_30 = arith.constant 0 : index
    %129 = vector.load %arg7[%c0_29, %c0_30] : memref<8x32xf32, #tpu.memory_space<vmem>>, vector<8x32xf32>
    tpu.vector_store %arg7[%c0_29, %c0_30], %128 {strides = array<i32>} : memref<8x32xf32, #tpu.memory_space<vmem>>, vector<8x32xf32>,
    return
  }
  func.func @transform_0(%arg0: i32) -> (i32, i32) {
    %c0_i32 = arith.constant 0 : i32
    %c0_i32_0 = arith.constant 0 : i32
    return %arg0, %c0_i32 : i32, i32
  }
  func.func @transform_1(%arg0: i32) -> (i32, i32) {
    %c0_i32 = arith.constant 0 : i32
    %c0_i32_0 = arith.constant 0 : i32
    %c0_i32_1 = arith.constant 0 : i32
    return %c0_i32, %c0_i32_0 : i32, i32
  }
  func.func @transform_2(%arg0: i32) -> (i32, i32) {
    %c0_i32 = arith.constant 0 : i32
    %c0_i32_0 = arith.constant 0 : i32
    %c0_i32_1 = arith.constant 0 : i32
    return %c0_i32, %c0_i32_0 : i32, i32
  }
  func.func @transform_3(%arg0: i32) -> (i32, i32) {
    %c0_i32 = arith.constant 0 : i32
    %c0_i32_0 = arith.constant 0 : i32
    %c0_i32_1 = arith.constant 0 : i32
    return %c0_i32, %c0_i32_0 : i32, i32
  }
  func.func @transform_4(%arg0: i32) -> (i32, i32) {
    %c0_i32 = arith.constant 0 : i32
    %c0_i32_0 = arith.constant 0 : i32
    %c0_i32_1 = arith.constant 0 : i32
    return %c0_i32, %c0_i32_0 : i32, i32
  }
  func.func @transform_5(%arg0: i32) -> (i32, i32) {
    %c0_i32 = arith.constant 0 : i32
    %c0_i32_0 = arith.constant 0 : i32
    %c0_i32_1 = arith.constant 0 : i32
    return %c0_i32, %c0_i32_0 : i32, i32
  }
  func.func @transform_6(%arg0: i32) -> (i32, i32) {
    %c0_i32 = arith.constant 0 : i32
    %c0_i32_0 = arith.constant 0 : i32
    return %arg0, %c0_i32 : i32, i32
  }
}

</mosaic_0001>

<llo_original>
// kernel: tpu_custom_call.1
$region0: #{tpu_custom_call.1}
  #allocation0 [shape = 'u32[]', space=smem, size = 0x4, offset = 0x4, fixed_abs, tag = 'smem constant byte address 0x4 - core index']
  #allocation1 [shape = 'u32[144,128]{1,0:T(1,128)}', space=vmem, size = 0x12000, scoped, tag = 'internal scratch']
  %s0 = inlined_call_operand.vmem [shape: f32[16,32], index: 0, kind: input, shape index: {}]
  %s1 = inlined_call_operand.vmem [shape: bf16[32,96], index: 1, kind: input, shape index: {}]
  %s2 = inlined_call_operand.vmem [shape: bf16[32,32], index: 2, kind: input, shape index: {}]
  %s3 = inlined_call_operand.hbm [shape: bf16[32,64], index: 3, kind: input, shape index: {}]
  %s4 = inlined_call_operand.vmem [shape: bf16[64,32], index: 4, kind: input, shape index: {}]
  %s5 = inlined_call_operand.vmem [shape: f32[8,96], index: 5, kind: input, shape index: {}]
  %s6 = inlined_call_operand.hbm [shape: f32[16,32], index: 6, kind: output, shape index: {}]
  %s7 = sld [smem:[#allocation0]]
  $region61: #{tpu_custom_call.1} parent=0
    _
  %s9 = ssub.s32 1, %s7
  %s10 = scalar_select 0, %s9, %s7
  $region1: #{tpu_custom_call.1} parent=0
    #allocation2 [shape = 'u8[8192]{0}', space=vmem, size = 0x2000, scoped, tag = 'input window, operand 3, single buffered']
    #allocation3 [shape = 's32[2]{0}', space=sflag, size = 0x8, scoped, tag = 'scoped memory for tpu_custom_call.1']
    #allocation4 [shape = 's32[2]{0}', space=sflag, size = 0x8, scoped, tag = 'scoped memory for tpu_custom_call.1']
    #allocation5 [shape = 'u8[8192]{0}', space=vmem, size = 0x2000, scoped, tag = 'output window, operand 0']
    %11 = vsyncpa [#allocation3], 0
    %12 = vsyncpa [#allocation4], 0
    %s13 = scalar_lea.sflag [#allocation4], 1
    %14 = vsyncpa %s13, 0
    loop: start=0, step=1, limit=4
    $region2: #{tpu_custom_call.1} parent=1 // loop_pre_header
      _
    $region3: #{tpu_custom_call.1} parent=1 // loop_header
      %s16 = sphi 0, %s20
      %p17 = scmp.ge.s32.totalorder %s16, 4
      %s26 = sphi 0, %s28
      %s29 = sphi 0, %s26
      %s30 = sphi 0, %s29
      %s46 = sphi 0, %s30
      %s50 = sphi 0, %s50
      %s52 = sphi 0, %s50
      %s53 = sphi 0, %s52
      %s67 = sphi 0, %s53
      %s71 = sphi 0, %s71
      %s73 = sphi 0, %s71
      %s74 = sphi 0, %s73
      %s88 = sphi 0, %s74
      %s92 = sphi 0, %s92
      %s94 = sphi 0, %s92
      %s95 = sphi 0, %s94
      %s109 = sphi 0, %s95
      %s113 = sphi 0, %s113
      %s115 = sphi 0, %s113
      %s116 = sphi 0, %s115
      %s130 = sphi 0, %s116
      %s134 = sphi 0, %s134
      %s136 = sphi 0, %s134
      %s137 = sphi 0, %s136
      %s151 = sphi 0, %s137
      %s157 = sphi 0, %s159
      %s160 = sphi 0, %s157
      %s161 = sphi 0, %s160
      %s177 = sphi 0, %s161
    $region4: #{tpu_custom_call.1} parent=1 // loop_header_branch
      %19 = sbr.rel (%p17) target = $region8
    $region5: #{tpu_custom_call.1} parent=1 // loop_body
      %s21 = ssub.s32 %s16, 1
      %s22 = ssub.s32 %s16, 2
      %s23 = sadd.s32 %s16, 1
      %s24 = ssub.s32 %s16, %s23
      %p25 = scmp.eq.s32.totalorder %s24, 0
      %s27 = sadd.s32 %s26, 1
      %s28 = scalar_select %p25, %s26, %s27
      %p31 = pneg %p25
      %p32 = scmp.eq.s32.totalorder %s16, 1
      %p33 = por %p31, %p32
      %p34 = scmp.ne.s32.totalorder %s26, %s29
      %p35 = scmp.eq.s32.totalorder %s16, 0
      %p36 = por %p34, %p35
      %p37 = scmp.ne.s32.totalorder %s26, %s29
      %p38 = scmp.eq.s32.totalorder %s21, 1
      %p39 = por %p37, %p38
      %p40 = scmp.ne.s32.totalorder %s29, %s30
      %p41 = scmp.eq.s32.totalorder %s21, 0
      %p42 = por %p40, %p41
      %p43 = scmp.ne.s32.totalorder %s29, %s30
      %p44 = scmp.eq.s32.totalorder %s22, 1
      %p45 = por %p43, %p44
      %p47 = scmp.ne.s32.totalorder %s30, %s46
      %p48 = scmp.eq.s32.totalorder %s22, 0
      %p49 = por %p47, %p48
      %s51 = sadd.s32 %s50, 1
      %p54 = scmp.eq.s32.totalorder %s16, 1
      %p55 = scmp.ne.s32.totalorder %s50, %s52
      %p56 = scmp.eq.s32.totalorder %s16, 0
      %p57 = por %p55, %p56
      %p58 = scmp.ne.s32.totalorder %s50, %s52
      %p59 = scmp.eq.s32.totalorder %s21, 1
      %p60 = por %p58, %p59
      %p61 = scmp.ne.s32.totalorder %s52, %s53
      %p62 = scmp.eq.s32.totalorder %s21, 0
      %p63 = por %p61, %p62
      %p64 = scmp.ne.s32.totalorder %s52, %s53
      %p65 = scmp.eq.s32.totalorder %s22, 1
      %p66 = por %p64, %p65
      %p68 = scmp.ne.s32.totalorder %s53, %s67
      %p69 = scmp.eq.s32.totalorder %s22, 0
      %p70 = por %p68, %p69
      %s72 = sadd.s32 %s71, 1
      %p75 = scmp.eq.s32.totalorder %s16, 1
      %p76 = scmp.ne.s32.totalorder %s71, %s73
      %p77 = scmp.eq.s32.totalorder %s16, 0
      %p78 = por %p76, %p77
      %p79 = scmp.ne.s32.totalorder %s71, %s73
      %p80 = scmp.eq.s32.totalorder %s21, 1
      %p81 = por %p79, %p80
      %p82 = scmp.ne.s32.totalorder %s73, %s74
      %p83 = scmp.eq.s32.totalorder %s21, 0
      %p84 = por %p82, %p83
      %p85 = scmp.ne.s32.totalorder %s73, %s74
      %p86 = scmp.eq.s32.totalorder %s22, 1
      %p87 = por %p85, %p86
      %p89 = scmp.ne.s32.totalorder %s74, %s88
      %p90 = scmp.eq.s32.totalorder %s22, 0
      %p91 = por %p89, %p90
      %s93 = sadd.s32 %s92, 1
      %p96 = scmp.eq.s32.totalorder %s16, 1
      %p97 = scmp.ne.s32.totalorder %s92, %s94
      %p98 = scmp.eq.s32.totalorder %s16, 0
      %p99 = por %p97, %p98
      %p100 = scmp.ne.s32.totalorder %s92, %s94
      %p101 = scmp.eq.s32.totalorder %s21, 1
      %p102 = por %p100, %p101
      %p103 = scmp.ne.s32.totalorder %s94, %s95
      %p104 = scmp.eq.s32.totalorder %s21, 0
      %p105 = por %p103, %p104
      %p106 = scmp.ne.s32.totalorder %s94, %s95
      %p107 = scmp.eq.s32.totalorder %s22, 1
      %p108 = por %p106, %p107
      %p110 = scmp.ne.s32.totalorder %s95, %s109
      %p111 = scmp.eq.s32.totalorder %s22, 0
      %p112 = por %p110, %p111
      %s114 = sadd.s32 %s113, 1
      %p117 = scmp.eq.s32.totalorder %s16, 1
      %p118 = scmp.ne.s32.totalorder %s113, %s115
      %p119 = scmp.eq.s32.totalorder %s16, 0
      %p120 = por %p118, %p119
      %p121 = scmp.ne.s32.totalorder %s113, %s115
      %p122 = scmp.eq.s32.totalorder %s21, 1
      %p123 = por %p121, %p122
      %p124 = scmp.ne.s32.totalorder %s115, %s116
      %p125 = scmp.eq.s32.totalorder %s21, 0
      %p126 = por %p124, %p125
      %p127 = scmp.ne.s32.totalorder %s115, %s116
      %p128 = scmp.eq.s32.totalorder %s22, 1
      %p129 = por %p127, %p128
      %p131 = scmp.ne.s32.totalorder %s116, %s130
      %p132 = scmp.eq.s32.totalorder %s22, 0
      %p133 = por %p131, %p132
      %s135 = sadd.s32 %s134, 1
      %p138 = scmp.eq.s32.totalorder %s16, 1
      %p139 = scmp.ne.s32.totalorder %s134, %s136
      %p140 = scmp.eq.s32.totalorder %s16, 0
      %p141 = por %p139, %p140
      %p142 = scmp.ne.s32.totalorder %s134, %s136
      %p143 = scmp.eq.s32.totalorder %s21, 1
      %p144 = por %p142, %p143
      %p145 = scmp.ne.s32.totalorder %s136, %s137
      %p146 = scmp.eq.s32.totalorder %s21, 0
      %p147 = por %p145, %p146
      %p148 = scmp.ne.s32.totalorder %s136, %s137
      %p149 = scmp.eq.s32.totalorder %s22, 1
      %p150 = por %p148, %p149
      %p152 = scmp.ne.s32.totalorder %s137, %s151
      %p153 = scmp.eq.s32.totalorder %s22, 0
      %p154 = por %p152, %p153
      %s155 = ssub.s32 %s16, %s23
      %p156 = scmp.eq.s32.totalorder %s155, 0
      %s158 = sadd.s32 %s157, 1
      %s159 = scalar_select %p156, %s157, %s158
      %p162 = pneg %p156
      %p163 = scmp.eq.s32.totalorder %s16, 1
      %p164 = por %p162, %p163
      %p165 = scmp.ne.s32.totalorder %s157, %s160
      %p166 = scmp.eq.s32.totalorder %s16, 0
      %p167 = por %p165, %p166
      %p168 = scmp.ne.s32.totalorder %s157, %s160
      %p169 = scmp.eq.s32.totalorder %s21, 1
      %p170 = por %p168, %p169
      %p171 = scmp.ne.s32.totalorder %s160, %s161
      %p172 = scmp.eq.s32.totalorder %s21, 0
      %p173 = por %p171, %p172
      %p174 = scmp.ne.s32.totalorder %s160, %s161
      %p175 = scmp.eq.s32.totalorder %s22, 1
      %p176 = por %p174, %p175
      %p178 = scmp.ne.s32.totalorder %s161, %s177
      %p179 = scmp.eq.s32.totalorder %s22, 0
      %p180 = por %p178, %p179
      %p181 = scmp.le.s32.totalorder 1, %s16
      %p182 = scmp.lt.s32.totalorder %s16, 3
      %p183 = pnand %p181, %p182
      %p184 = pneg %p183
      // Predicated region
      $region9: #{tpu_custom_call.1} parent=5 // pred_check
        _
      $region10: #{tpu_custom_call.1} parent=5 // pred_check_branch
        %186 = sbr.rel (%p183) target = $region12
      $region11: #{tpu_custom_call.1} parent=5 // pred_region
        %s187 = ssub.s32 %s16, 1
        // Predicated region
        $region13: #{tpu_custom_call.1} parent=11 // pred_check
          %p188 = pneg %p63
        $region14: #{tpu_custom_call.1} parent=11 // pred_check_branch
          %190 = sbr.rel (%p188) target = $region16
        $region15: #{tpu_custom_call.1} parent=11 // pred_region
          _
        $region16: #{tpu_custom_call.1} parent=11 // pred_fallthru
          _
        // Predicated region
        $region17: #{tpu_custom_call.1} parent=11 // pred_check
          %p191 = pneg %p84
        $region18: #{tpu_custom_call.1} parent=11 // pred_check_branch
          %193 = sbr.rel (%p191) target = $region20
        $region19: #{tpu_custom_call.1} parent=11 // pred_region
          _
        $region20: #{tpu_custom_call.1} parent=11 // pred_fallthru
          _
        // Predicated region
        $region21: #{tpu_custom_call.1} parent=11 // pred_check
          %p194 = pneg %p105
        $region22: #{tpu_custom_call.1} parent=11 // pred_check_branch
          %196 = sbr.rel (%p194) target = $region24
        $region23: #{tpu_custom_call.1} parent=11 // pred_region
          %s198 = ssub.s32 256, 256
          %199 = vsyncadd [#allocation3], %s198
          %s200 = sshll.u32 [#allocation2], 4
          %s201 = int_to_ptr.vmem [resolvable:$true] %s200
          %206 = dma.hbm_to_vmem [thread:$0]  %s3, 256, %s201, [#allocation3], 64, 64, 4
        $region24: #{tpu_custom_call.1} parent=11 // pred_fallthru
          _
        // Predicated region
        $region25: #{tpu_custom_call.1} parent=11 // pred_check
          %p207 = pneg %p126
        $region26: #{tpu_custom_call.1} parent=11 // pred_check_branch
          %209 = sbr.rel (%p207) target = $region28
        $region27: #{tpu_custom_call.1} parent=11 // pred_region
          _
        $region28: #{tpu_custom_call.1} parent=11 // pred_fallthru
          _
        // Predicated region
        $region29: #{tpu_custom_call.1} parent=11 // pred_check
          %p210 = pneg %p147
        $region30: #{tpu_custom_call.1} parent=11 // pred_check_branch
          %212 = sbr.rel (%p210) target = $region32
        $region31: #{tpu_custom_call.1} parent=11 // pred_region
          _
        $region32: #{tpu_custom_call.1} parent=11 // pred_fallthru
          _
      $region12: #{tpu_custom_call.1} parent=5 // pred_fallthru
        _
      %p213 = scmp.lt.s32.totalorder %s16, 2
      // Predicated region
      $region33: #{tpu_custom_call.1} parent=5 // pred_check
        %p214 = pneg %p213
      $region34: #{tpu_custom_call.1} parent=5 // pred_check_branch
        %216 = sbr.rel (%p214) target = $region36
      $region35: #{tpu_custom_call.1} parent=5 // pred_region
        // Predicated region
        $region37: #{tpu_custom_call.1} parent=35 // pred_check
          %p217 = pneg %p36
        $region38: #{tpu_custom_call.1} parent=35 // pred_check_branch
          %219 = sbr.rel (%p217) target = $region40
        $region39: #{tpu_custom_call.1} parent=35 // pred_region
          %p220 = scmp.lt.s32.totalorder %s16, 1
          %s221 = scalar_select %p220, %s16, 1
          %s222 = smul.addr %s221, 8
          %s223 = scalar_lea.vmem %s0, %s222
        $region40: #{tpu_custom_call.1} parent=35 // pred_fallthru
          _
      $region36: #{tpu_custom_call.1} parent=5 // pred_fallthru
        _
      %p224 = scmp.le.s32.totalorder 1, %s16
      %p225 = scmp.lt.s32.totalorder %s16, 3
      %p226 = pnand %p224, %p225
      %p227 = pneg %p226
      // Predicated region
      $region41: #{tpu_custom_call.1} parent=5 // pred_check
        _
      $region42: #{tpu_custom_call.1} parent=5 // pred_check_branch
        %229 = sbr.rel (%p226) target = $region44
      $region43: #{tpu_custom_call.1} parent=5 // pred_region
        %s230 = ssub.s32 %s16, 1
        // Predicated region
        $region45: #{tpu_custom_call.1} parent=43 // pred_check
          %p231 = pneg %p105
        $region46: #{tpu_custom_call.1} parent=43 // pred_check_branch
          %233 = sbr.rel (%p231) target = $region48
        $region47: #{tpu_custom_call.1} parent=43 // pred_region
          %234 = dma.done [#allocation3], 256
        $region48: #{tpu_custom_call.1} parent=43 // pred_fallthru
          _
        %p235 = scmp.lt.s32.totalorder %s21, 1
        %s236 = scalar_select %p235, %s21, 1
        %s237 = smul.addr %s236, 8
        %s238 = scalar_lea.vmem %s0, %s237
        %p239 = pneg %p42
        %p240 = pneg %p39
        %p241 = pneg %p63
        %p242 = pneg %p60
        %p243 = pneg %p84
        %p244 = pneg %p81
        %p245 = pneg %p105
        %p246 = pneg %p102
        %p247 = pneg %p126
        %p248 = pneg %p123
        %p249 = pneg %p147
        %p250 = pneg %p144
        %p251 = pneg %p173
        %p252 = pneg %p170
        %s253 = sand.u32 %s160, 1
        %s254 = scalar_lea.sflag [#allocation4], %s253
        %s255 = sand.u32 %s160, 1
        %s256 = smul.addr %s255, 8
        %s257 = scalar_lea.vmem [#allocation5], %s256
        %p258 = scmp.lt.s32.totalorder %s21, 1
        %s259 = scalar_select %p258, %s21, 1
        %s260 = smul.addr %s259, 8
        %s261 = scalar_lea.vmem %s0, %s260
        %v263 = vld [vmem:[%s261] sm:$0xff]
        %v264 = vld [vmem:[%s5] sm:$0xff]
        %v265 = vpack.c.bf16 %v263, %v263
        %v266 = vld [vmem:[%s1] sm:$0xf]
        %v267 = vld [vmem:[%s1 + $0x4] sm:$0xf]
        %v268 = vld [vmem:[%s1 + $0x8] sm:$0xf]
        %v269 = vld [vmem:[%s1 + $0xc] sm:$0xf]
        %v270 = vlaneseq
        %v271 = vshrl.u32 %v270, 7
        %v272 = vsub.s32 0, %v271
        %v273 = vrot.slane %v264, %v272
        %v278 = vunpack.c.l.b16 %v266
        %v279 = vunpack.c.l.b16 %v267
        %v280 = vunpack.c.l.b16 %v268
        %v281 = vunpack.c.l.b16 %v269
        %v282 = vpack.c.b16 %v279, %v278
        %v283 = vpack.c.b16 %v281, %v280
        %vm286 = vcmask 261120
        %v288 = vsel %vm286, %v265, 0
        %290 = vmatprep.subr.bf16.mxu0 0
        %291 = vmatpush1.bf16.msra.mxu0 0
        %292 = vmatprep.subr.bf16.mxu0 0
        %293 = vmatpush1.bf16.msra.mxu0 0
        %294 = vmatprep.subr.bf16.mxu0 0
        %295 = vmatpush1.bf16.msra.mxu0 0
        %296 = vmatprep.subr.bf16.mxu0 0
        %297 = vmatpush1.bf16.msra.mxu0 0
        %298 = vmatprep.subr.bf16.mxu0 0
        %299 = vmatpush1.bf16.msra.mxu0 0
        %300 = vmatprep.subr.bf16.mxu0 0
        %301 = vmatpush1.bf16.msra.mxu0 0
        %302 = vmatprep.subr.bf16.mxu0 0
        %303 = vmatpush1.bf16.msra.mxu0 %v283
        %304 = vmatprep.subr.bf16.mxu0 0
        %305 = vmatpush1.bf16.msra.mxu0 %v282
        %306 = vmatprep.subr.bf16.mxu0 0
        %307 = vmatpush2.bf16.msra.mxu0 0
        %308 = vmatprep.subr.bf16.mxu0 0
        %309 = vmatpush2.bf16.msra.mxu0 0
        %310 = vmatprep.subr.bf16.mxu0 0
        %311 = vmatpush2.bf16.msra.mxu0 0
        %312 = vmatprep.subr.bf16.mxu0 0
        %313 = vmatpush2.bf16.msra.mxu0 0
        %314 = vmatprep.subr.bf16.mxu0 0
        %315 = vmatpush2.bf16.msra.mxu0 0
        %316 = vmatprep.subr.bf16.mxu0 0
        %317 = vmatpush2.bf16.msra.mxu0 0
        %318 = vmatprep.subr.bf16.mxu0 0
        %319 = vmatpush2.bf16.msra.mxu0 0
        %320 = vmatprep.subr.bf16.mxu0 0
        %321 = vmatpush2.bf16.msra.mxu0 0
        %322 = vmatprep.mubr.bf16.mxu0 0
        %323 = vmatmul.mubr.bf16.gmra.mxu0 %v288
        %v324 = vpop.f32.mrf.mxu0
        %v325 = vadd.f32 %v273, %v324
        %v326 = vpop.f32.mrf.mxu0
        %v327 = vpop.f32.mrf.mxu0
        %v328 = vpop.f32.mrf.mxu0
        %329 = vdwg.mxu0
        %331 = vrot.lane.b32.xlu0 %v325, 120
        %v332 = vpop.permute.xlu0 %331
        %333 = vrot.lane.b32.xlu0 %v325, 112
        %v334 = vpop.permute.xlu0 %333
        %335 = vrot.lane.b32.xlu0 %v325, 104
        %v336 = vpop.permute.xlu0 %335
        %337 = vrot.lane.b32.xlu0 %v325, 96
        %v338 = vpop.permute.xlu0 %337
        %vm339 = vcmask 64512
        %v340 = vsel %vm339, %v325, 0
        %v342 = vsel %vm339, %v338, 0
        %344 = vmatprep.subr.mxu0 0.0
        %345 = vmatpush1.xpose.msra.mxu0 0.0
        %346 = vmatprep.subr.mxu0 0.0
        %347 = vmatpush1.xpose.msra.mxu0 0.0
        %348 = vmatprep.subr.mxu0 0.0
        %349 = vmatpush1.xpose.msra.mxu0 0.0
        %350 = vmatprep.subr.mxu0 0.0
        %351 = vmatpush1.xpose.msra.mxu0 0.0
        %352 = vmatprep.subr.mxu0 0.0
        %353 = vmatpush1.xpose.msra.mxu0 0.0
        %354 = vmatprep.subr.mxu0 0.0
        %355 = vmatpush1.xpose.msra.mxu0 0.0
        %356 = vmatprep.subr.mxu0 0.0
        %357 = vmatpush1.xpose.msra.mxu0 0.0
        %358 = vmatprep.subr.mxu0 0.0
        %359 = vmatpush1.xpose.msra.mxu0 0.0
        %360 = vmatprep.subr.mxu0 0.0
        %361 = vmatpush1.xpose.msra.mxu0 0.0
        %362 = vmatprep.subr.mxu0 0.0
        %363 = vmatpush1.xpose.msra.mxu0 0.0
        %364 = vmatprep.subr.mxu0 0.0
        %365 = vmatpush1.xpose.msra.mxu0 0.0
        %366 = vmatprep.subr.mxu0 0.0
        %367 = vmatpush1.xpose.msra.mxu0 0.0
        %368 = vmatprep.subr.mxu0 0.0
        %369 = vmatpush1.xpose.msra.mxu0 0.0
        %370 = vmatprep.subr.mxu0 0.0
        %371 = vmatpush1.xpose.msra.mxu0 0.0
        %372 = vmatprep.subr.mxu0 0.0
        %373 = vmatpush1.xpose.msra.mxu0 0.0
        %374 = vmatprep.subr.mxu0 0.0
        %375 = vmatpush1.xpose.msra.mxu0 %v342
        %376 = vmatprep.subr.mxu0 0.0
        %377 = vmatpush2.xpose.msra.mxu0 0.0
        %378 = vmatprep.subr.mxu0 0.0
        %379 = vmatpush2.xpose.msra.mxu0 0.0
        %380 = vmatprep.subr.mxu0 0.0
        %381 = vmatpush2.xpose.msra.mxu0 0.0
        %382 = vmatprep.subr.mxu0 0.0
        %383 = vmatpush2.xpose.msra.mxu0 0.0
        %384 = vmatprep.subr.mxu0 0.0
        %385 = vmatpush2.xpose.msra.mxu0 0.0
        %386 = vmatprep.subr.mxu0 0.0
        %387 = vmatpush2.xpose.msra.mxu0 0.0
        %388 = vmatprep.subr.mxu0 0.0
        %389 = vmatpush2.xpose.msra.mxu0 0.0
        %390 = vmatprep.subr.mxu0 0.0
        %391 = vmatpush2.xpose.msra.mxu0 0.0
        %392 = vmatprep.subr.mxu0 0.0
        %393 = vmatpush2.xpose.msra.mxu0 0.0
        %394 = vmatprep.subr.mxu0 0.0
        %395 = vmatpush2.xpose.msra.mxu0 0.0
        %396 = vmatprep.subr.mxu0 0.0
        %397 = vmatpush2.xpose.msra.mxu0 0.0
        %398 = vmatprep.subr.mxu0 0.0
        %399 = vmatpush2.xpose.msra.mxu0 0.0
        %400 = vmatprep.subr.mxu0 0.0
        %401 = vmatpush2.xpose.msra.mxu0 0.0
        %402 = vmatprep.subr.mxu0 0.0
        %403 = vmatpush2.xpose.msra.mxu0 0.0
        %404 = vmatprep.subr.mxu0 0.0
        %405 = vmatpush2.xpose.msra.mxu0 0.0
        %406 = vmatprep.subr.mxu0 0.0
        %407 = vmatpush2.xpose.msra.mxu0 0.0
        %408 = vmatprep.mubr.f32.mxu0 0.0
        %409 = vmatmul.mubr.f32.gmra.mxu0 %v340
        %v410 = vpop.f32.mrf.mxu0
        %v411 = vadd.f32 0.0, %v410
        %v412 = vpop.f32.mrf.mxu0
        %413 = vdwg.mxu0
        %414 = vrot.lane.b32.xlu0 %v332, 96
        %v415 = vpop.permute.xlu0 %414
        %v416 = vsel %vm339, %v332, 0
        %v418 = vsel %vm339, %v415, 0
        %420 = vmatprep.subr.mxu0 0.0
        %421 = vmatpush1.xpose.msra.mxu0 0.0
        %422 = vmatprep.subr.mxu0 0.0
        %423 = vmatpush1.xpose.msra.mxu0 0.0
        %424 = vmatprep.subr.mxu0 0.0
        %425 = vmatpush1.xpose.msra.mxu0 0.0
        %426 = vmatprep.subr.mxu0 0.0
        %427 = vmatpush1.xpose.msra.mxu0 0.0
        %428 = vmatprep.subr.mxu0 0.0
        %429 = vmatpush1.xpose.msra.mxu0 0.0
        %430 = vmatprep.subr.mxu0 0.0
        %431 = vmatpush1.xpose.msra.mxu0 0.0
        %432 = vmatprep.subr.mxu0 0.0
        %433 = vmatpush1.xpose.msra.mxu0 0.0
        %434 = vmatprep.subr.mxu0 0.0
        %435 = vmatpush1.xpose.msra.mxu0 0.0
        %436 = vmatprep.subr.mxu0 0.0
        %437 = vmatpush1.xpose.msra.mxu0 0.0
        %438 = vmatprep.subr.mxu0 0.0
        %439 = vmatpush1.xpose.msra.mxu0 0.0
        %440 = vmatprep.subr.mxu0 0.0
        %441 = vmatpush1.xpose.msra.mxu0 0.0
        %442 = vmatprep.subr.mxu0 0.0
        %443 = vmatpush1.xpose.msra.mxu0 0.0
        %444 = vmatprep.subr.mxu0 0.0
        %445 = vmatpush1.xpose.msra.mxu0 0.0
        %446 = vmatprep.subr.mxu0 0.0
        %447 = vmatpush1.xpose.msra.mxu0 0.0
        %448 = vmatprep.subr.mxu0 0.0
        %449 = vmatpush1.xpose.msra.mxu0 0.0
        %450 = vmatprep.subr.mxu0 0.0
        %451 = vmatpush1.xpose.msra.mxu0 %v418
        %452 = vmatprep.subr.mxu0 0.0
        %453 = vmatpush2.xpose.msra.mxu0 0.0
        %454 = vmatprep.subr.mxu0 0.0
        %455 = vmatpush2.xpose.msra.mxu0 0.0
        %456 = vmatprep.subr.mxu0 0.0
        %457 = vmatpush2.xpose.msra.mxu0 0.0
        %458 = vmatprep.subr.mxu0 0.0
        %459 = vmatpush2.xpose.msra.mxu0 0.0
        %460 = vmatprep.subr.mxu0 0.0
        %461 = vmatpush2.xpose.msra.mxu0 0.0
        %462 = vmatprep.subr.mxu0 0.0
        %463 = vmatpush2.xpose.msra.mxu0 0.0
        %464 = vmatprep.subr.mxu0 0.0
        %465 = vmatpush2.xpose.msra.mxu0 0.0
        %466 = vmatprep.subr.mxu0 0.0
        %467 = vmatpush2.xpose.msra.mxu0 0.0
        %468 = vmatprep.subr.mxu0 0.0
        %469 = vmatpush2.xpose.msra.mxu0 0.0
        %470 = vmatprep.subr.mxu0 0.0
        %471 = vmatpush2.xpose.msra.mxu0 0.0
        %472 = vmatprep.subr.mxu0 0.0
        %473 = vmatpush2.xpose.msra.mxu0 0.0
        %474 = vmatprep.subr.mxu0 0.0
        %475 = vmatpush2.xpose.msra.mxu0 0.0
        %476 = vmatprep.subr.mxu0 0.0
        %477 = vmatpush2.xpose.msra.mxu0 0.0
        %478 = vmatprep.subr.mxu0 0.0
        %479 = vmatpush2.xpose.msra.mxu0 0.0
        %480 = vmatprep.subr.mxu0 0.0
        %481 = vmatpush2.xpose.msra.mxu0 0.0
        %482 = vmatprep.subr.mxu0 0.0
        %483 = vmatpush2.xpose.msra.mxu0 0.0
        %484 = vmatprep.mubr.f32.mxu0 0.0
        %485 = vmatmul.mubr.f32.gmra.mxu0 %v416
        %v486 = vpop.f32.mrf.mxu0
        %v487 = vadd.f32 0.0, %v486
        %v488 = vpop.f32.mrf.mxu0
        %489 = vdwg.mxu0
        %490 = vrot.lane.b32.xlu0 %v334, 96
        %v491 = vpop.permute.xlu0 %490
        %v492 = vsel %vm339, %v334, 0
        %v494 = vsel %vm339, %v491, 0
        %496 = vmatprep.subr.mxu0 0.0
        %497 = vmatpush1.xpose.msra.mxu0 0.0
        %498 = vmatprep.subr.mxu0 0.0
        %499 = vmatpush1.xpose.msra.mxu0 0.0
        %500 = vmatprep.subr.mxu0 0.0
        %501 = vmatpush1.xpose.msra.mxu0 0.0
        %502 = vmatprep.subr.mxu0 0.0
        %503 = vmatpush1.xpose.msra.mxu0 0.0
        %504 = vmatprep.subr.mxu0 0.0
        %505 = vmatpush1.xpose.msra.mxu0 0.0
        %506 = vmatprep.subr.mxu0 0.0
        %507 = vmatpush1.xpose.msra.mxu0 0.0
        %508 = vmatprep.subr.mxu0 0.0
        %509 = vmatpush1.xpose.msra.mxu0 0.0
        %510 = vmatprep.subr.mxu0 0.0
        %511 = vmatpush1.xpose.msra.mxu0 0.0
        %512 = vmatprep.subr.mxu0 0.0
        %513 = vmatpush1.xpose.msra.mxu0 0.0
        %514 = vmatprep.subr.mxu0 0.0
        %515 = vmatpush1.xpose.msra.mxu0 0.0
        %516 = vmatprep.subr.mxu0 0.0
        %517 = vmatpush1.xpose.msra.mxu0 0.0
        %518 = vmatprep.subr.mxu0 0.0
        %519 = vmatpush1.xpose.msra.mxu0 0.0
        %520 = vmatprep.subr.mxu0 0.0
        %521 = vmatpush1.xpose.msra.mxu0 0.0
        %522 = vmatprep.subr.mxu0 0.0
        %523 = vmatpush1.xpose.msra.mxu0 0.0
        %524 = vmatprep.subr.mxu0 0.0
        %525 = vmatpush1.xpose.msra.mxu0 0.0
        %526 = vmatprep.subr.mxu0 0.0
        %527 = vmatpush1.xpose.msra.mxu0 %v494
        %528 = vmatprep.subr.mxu0 0.0
        %529 = vmatpush2.xpose.msra.mxu0 0.0
        %530 = vmatprep.subr.mxu0 0.0
        %531 = vmatpush2.xpose.msra.mxu0 0.0
        %532 = vmatprep.subr.mxu0 0.0
        %533 = vmatpush2.xpose.msra.mxu0 0.0
        %534 = vmatprep.subr.mxu0 0.0
        %535 = vmatpush2.xpose.msra.mxu0 0.0
        %536 = vmatprep.subr.mxu0 0.0
        %537 = vmatpush2.xpose.msra.mxu0 0.0
        %538 = vmatprep.subr.mxu0 0.0
        %539 = vmatpush2.xpose.msra.mxu0 0.0
        %540 = vmatprep.subr.mxu0 0.0
        %541 = vmatpush2.xpose.msra.mxu0 0.0
        %542 = vmatprep.subr.mxu0 0.0
        %543 = vmatpush2.xpose.msra.mxu0 0.0
        %544 = vmatprep.subr.mxu0 0.0
        %545 = vmatpush2.xpose.msra.mxu0 0.0
        %546 = vmatprep.subr.mxu0 0.0
        %547 = vmatpush2.xpose.msra.mxu0 0.0
        %548 = vmatprep.subr.mxu0 0.0
        %549 = vmatpush2.xpose.msra.mxu0 0.0
        %550 = vmatprep.subr.mxu0 0.0
        %551 = vmatpush2.xpose.msra.mxu0 0.0
        %552 = vmatprep.subr.mxu0 0.0
        %553 = vmatpush2.xpose.msra.mxu0 0.0
        %554 = vmatprep.subr.mxu0 0.0
        %555 = vmatpush2.xpose.msra.mxu0 0.0
        %556 = vmatprep.subr.mxu0 0.0
        %557 = vmatpush2.xpose.msra.mxu0 0.0
        %558 = vmatprep.subr.mxu0 0.0
        %559 = vmatpush2.xpose.msra.mxu0 0.0
        %560 = vmatprep.mubr.f32.mxu0 0.0
        %561 = vmatmul.mubr.f32.gmra.mxu0 %v492
        %v562 = vpop.f32.mrf.mxu0
        %v563 = vadd.f32 0.0, %v562
        %v564 = vpop.f32.mrf.mxu0
        %565 = vdwg.mxu0
        %566 = vrot.lane.b32.xlu0 %v336, 96
        %v567 = vpop.permute.xlu0 %566
        %v568 = vsel %vm339, %v336, 0
        %v570 = vsel %vm339, %v567, 0
        %572 = vmatprep.subr.mxu0 0.0
        %573 = vmatpush1.xpose.msra.mxu0 0.0
        %574 = vmatprep.subr.mxu0 0.0
        %575 = vmatpush1.xpose.msra.mxu0 0.0
        %576 = vmatprep.subr.mxu0 0.0
        %577 = vmatpush1.xpose.msra.mxu0 0.0
        %578 = vmatprep.subr.mxu0 0.0
        %579 = vmatpush1.xpose.msra.mxu0 0.0
        %580 = vmatprep.subr.mxu0 0.0
        %581 = vmatpush1.xpose.msra.mxu0 0.0
        %582 = vmatprep.subr.mxu0 0.0
        %583 = vmatpush1.xpose.msra.mxu0 0.0
        %584 = vmatprep.subr.mxu0 0.0
        %585 = vmatpush1.xpose.msra.mxu0 0.0
        %586 = vmatprep.subr.mxu0 0.0
        %587 = vmatpush1.xpose.msra.mxu0 0.0
        %588 = vmatprep.subr.mxu0 0.0
        %589 = vmatpush1.xpose.msra.mxu0 0.0
        %590 = vmatprep.subr.mxu0 0.0
        %591 = vmatpush1.xpose.msra.mxu0 0.0
        %592 = vmatprep.subr.mxu0 0.0
        %593 = vmatpush1.xpose.msra.mxu0 0.0
        %594 = vmatprep.subr.mxu0 0.0
        %595 = vmatpush1.xpose.msra.mxu0 0.0
        %596 = vmatprep.subr.mxu0 0.0
        %597 = vmatpush1.xpose.msra.mxu0 0.0
        %598 = vmatprep.subr.mxu0 0.0
        %599 = vmatpush1.xpose.msra.mxu0 0.0
        %600 = vmatprep.subr.mxu0 0.0
        %601 = vmatpush1.xpose.msra.mxu0 0.0
        %602 = vmatprep.subr.mxu0 0.0
        %603 = vmatpush1.xpose.msra.mxu0 %v570
        %604 = vmatprep.subr.mxu0 0.0
        %605 = vmatpush2.xpose.msra.mxu0 0.0
        %606 = vmatprep.subr.mxu0 0.0
        %607 = vmatpush2.xpose.msra.mxu0 0.0
        %608 = vmatprep.subr.mxu0 0.0
        %609 = vmatpush2.xpose.msra.mxu0 0.0
        %610 = vmatprep.subr.mxu0 0.0
        %611 = vmatpush2.xpose.msra.mxu0 0.0
        %612 = vmatprep.subr.mxu0 0.0
        %613 = vmatpush2.xpose.msra.mxu0 0.0
        %614 = vmatprep.subr.mxu0 0.0
        %615 = vmatpush2.xpose.msra.mxu0 0.0
        %616 = vmatprep.subr.mxu0 0.0
        %617 = vmatpush2.xpose.msra.mxu0 0.0
        %618 = vmatprep.subr.mxu0 0.0
        %619 = vmatpush2.xpose.msra.mxu0 0.0
        %620 = vmatprep.subr.mxu0 0.0
        %621 = vmatpush2.xpose.msra.mxu0 0.0
        %622 = vmatprep.subr.mxu0 0.0
        %623 = vmatpush2.xpose.msra.mxu0 0.0
        %624 = vmatprep.subr.mxu0 0.0
        %625 = vmatpush2.xpose.msra.mxu0 0.0
        %626 = vmatprep.subr.mxu0 0.0
        %627 = vmatpush2.xpose.msra.mxu0 0.0
        %628 = vmatprep.subr.mxu0 0.0
        %629 = vmatpush2.xpose.msra.mxu0 0.0
        %630 = vmatprep.subr.mxu0 0.0
        %631 = vmatpush2.xpose.msra.mxu0 0.0
        %632 = vmatprep.subr.mxu0 0.0
        %633 = vmatpush2.xpose.msra.mxu0 0.0
        %634 = vmatprep.subr.mxu0 0.0
        %635 = vmatpush2.xpose.msra.mxu0 0.0
        %636 = vmatprep.mubr.f32.mxu0 0.0
        %637 = vmatmul.mubr.f32.gmra.mxu0 %v568
        %v638 = vpop.f32.mrf.mxu0
        %v639 = vadd.f32 0.0, %v638
        %v640 = vpop.f32.mrf.mxu0
        %641 = vdwg.mxu0
        %v642 = vsel %vm339, %v411, -inf
        %643 = vmax.xlane.f32.xlu0 %v642
        %v644 = vpop.xlane.xlu0 %643
        %v645 = vsel %vm339, %v487, -inf
        %646 = vmax.xlane.f32.xlu0 %v645
        %v647 = vpop.xlane.xlu0 %646
        %v648 = vsel %vm339, %v563, -inf
        %649 = vmax.xlane.f32.xlu0 %v648
        %v650 = vpop.xlane.xlu0 %649
        %v651 = vsel %vm339, %v639, -inf
        %652 = vmax.xlane.f32.xlu0 %v651
        %v653 = vpop.xlane.xlu0 %652
        %v654 = vsub.f32 %v411, %v644
        %v655 = vsub.f32 %v487, %v647
        %v656 = vsub.f32 %v563, %v650
        %v657 = vsub.f32 %v639, %v653
        %v658 = vmul.f32 %v654, 1.442695
        %v659 = vpow.pop %v658
        %v660 = vmul.f32 %v655, 1.442695
        %v661 = vpow.pop %v660
        %v662 = vmul.f32 %v656, 1.442695
        %v663 = vpow.pop %v662
        %v664 = vmul.f32 %v657, 1.442695
        %v665 = vpow.pop %v664
        %v666 = vsel %vm339, %v659, 0.0
        %667 = vadd.xlane.f32.xlu0 %v666
        %v668 = vpop.xlane.xlu0 %667
        %v669 = vsel %vm339, %v661, 0.0
        %670 = vadd.xlane.f32.xlu0 %v669
        %v671 = vpop.xlane.xlu0 %670
        %v672 = vsel %vm339, %v663, 0.0
        %673 = vadd.xlane.f32.xlu0 %v672
        %v674 = vpop.xlane.xlu0 %673
        %v675 = vsel %vm339, %v665, 0.0
        %676 = vadd.xlane.f32.xlu0 %v675
        %v677 = vpop.xlane.xlu0 %676
        %v678 = vrcp.pop %v668
        %v679 = vrcp.pop %v671
        %v680 = vrcp.pop %v674
        %v681 = vrcp.pop %v677
        %v682 = vmul.f32 %v659, %v678
        %v683 = vmul.f32 %v661, %v679
        %v684 = vmul.f32 %v663, %v680
        %v685 = vmul.f32 %v665, %v681
        %686 = vrot.lane.b32.xlu0 %v325, 64
        %v687 = vpop.permute.xlu0 %686
        %v690 = vsel %vm339, %v682, 0
        %692 = vmatprep.subr.mxu0 0.0
        %693 = vmatpush1.msra.mxu0 0.0
        %694 = vmatprep.subr.mxu0 0.0
        %695 = vmatpush1.msra.mxu0 0.0
        %696 = vmatprep.subr.mxu0 0.0
        %697 = vmatpush1.msra.mxu0 0.0
        %698 = vmatprep.subr.mxu0 0.0
        %699 = vmatpush1.msra.mxu0 0.0
        %700 = vmatprep.subr.mxu0 0.0
        %701 = vmatpush1.msra.mxu0 0.0
        %702 = vmatprep.subr.mxu0 0.0
        %703 = vmatpush1.msra.mxu0 0.0
        %704 = vmatprep.subr.mxu0 0.0
        %705 = vmatpush1.msra.mxu0 0.0
        %706 = vmatprep.subr.mxu0 0.0
        %707 = vmatpush1.msra.mxu0 0.0
        %708 = vmatprep.subr.mxu0 0.0
        %709 = vmatpush1.msra.mxu0 0.0
        %710 = vmatprep.subr.mxu0 0.0
        %711 = vmatpush1.msra.mxu0 0.0
        %712 = vmatprep.subr.mxu0 0.0
        %713 = vmatpush1.msra.mxu0 0.0
        %714 = vmatprep.subr.mxu0 0.0
        %715 = vmatpush1.msra.mxu0 0.0
        %716 = vmatprep.subr.mxu0 0.0
        %717 = vmatpush1.msra.mxu0 0.0
        %718 = vmatprep.subr.mxu0 0.0
        %719 = vmatpush1.msra.mxu0 0.0
        %720 = vmatprep.subr.mxu0 0.0
        %721 = vmatpush1.msra.mxu0 0.0
        %722 = vmatprep.subr.mxu0 0.0
        %723 = vmatpush1.msra.mxu0 %v687
        %724 = vmatprep.subr.mxu0 0.0
        %725 = vmatpush2.msra.mxu0 0.0
        %726 = vmatprep.subr.mxu0 0.0
        %727 = vmatpush2.msra.mxu0 0.0
        %728 = vmatprep.subr.mxu0 0.0
        %729 = vmatpush2.msra.mxu0 0.0
        %730 = vmatprep.subr.mxu0 0.0
        %731 = vmatpush2.msra.mxu0 0.0
        %732 = vmatprep.subr.mxu0 0.0
        %733 = vmatpush2.msra.mxu0 0.0
        %734 = vmatprep.subr.mxu0 0.0
        %735 = vmatpush2.msra.mxu0 0.0
        %736 = vmatprep.subr.mxu0 0.0
        %737 = vmatpush2.msra.mxu0 0.0
        %738 = vmatprep.subr.mxu0 0.0
        %739 = vmatpush2.msra.mxu0 0.0
        %740 = vmatprep.subr.mxu0 0.0
        %741 = vmatpush2.msra.mxu0 0.0
        %742 = vmatprep.subr.mxu0 0.0
        %743 = vmatpush2.msra.mxu0 0.0
        %744 = vmatprep.subr.mxu0 0.0
        %745 = vmatpush2.msra.mxu0 0.0
        %746 = vmatprep.subr.mxu0 0.0
        %747 = vmatpush2.msra.mxu0 0.0
        %748 = vmatprep.subr.mxu0 0.0
        %749 = vmatpush2.msra.mxu0 0.0
        %750 = vmatprep.subr.mxu0 0.0
        %751 = vmatpush2.msra.mxu0 0.0
        %752 = vmatprep.subr.mxu0 0.0
        %753 = vmatpush2.msra.mxu0 0.0
        %754 = vmatprep.subr.mxu0 0.0
        %755 = vmatpush2.msra.mxu0 0.0
        %756 = vmatprep.mubr.f32.mxu0 0.0
        %757 = vmatmul.mubr.f32.gmra.mxu0 %v690
        %v758 = vpop.f32.mrf.mxu0
        %v759 = vadd.f32 0.0, %v758
        %v760 = vpop.f32.mrf.mxu0
        %761 = vdwg.mxu0
        %762 = vrot.lane.b32.xlu0 %v332, 64
        %v763 = vpop.permute.xlu0 %762
        %v766 = vsel %vm339, %v683, 0
        %768 = vmatprep.subr.mxu0 0.0
        %769 = vmatpush1.msra.mxu0 0.0
        %770 = vmatprep.subr.mxu0 0.0
        %771 = vmatpush1.msra.mxu0 0.0
        %772 = vmatprep.subr.mxu0 0.0
        %773 = vmatpush1.msra.mxu0 0.0
        %774 = vmatprep.subr.mxu0 0.0
        %775 = vmatpush1.msra.mxu0 0.0
        %776 = vmatprep.subr.mxu0 0.0
        %777 = vmatpush1.msra.mxu0 0.0
        %778 = vmatprep.subr.mxu0 0.0
        %779 = vmatpush1.msra.mxu0 0.0
        %780 = vmatprep.subr.mxu0 0.0
        %781 = vmatpush1.msra.mxu0 0.0
        %782 = vmatprep.subr.mxu0 0.0
        %783 = vmatpush1.msra.mxu0 0.0
        %784 = vmatprep.subr.mxu0 0.0
        %785 = vmatpush1.msra.mxu0 0.0
        %786 = vmatprep.subr.mxu0 0.0
        %787 = vmatpush1.msra.mxu0 0.0
        %788 = vmatprep.subr.mxu0 0.0
        %789 = vmatpush1.msra.mxu0 0.0
        %790 = vmatprep.subr.mxu0 0.0
        %791 = vmatpush1.msra.mxu0 0.0
        %792 = vmatprep.subr.mxu0 0.0
        %793 = vmatpush1.msra.mxu0 0.0
        %794 = vmatprep.subr.mxu0 0.0
        %795 = vmatpush1.msra.mxu0 0.0
        %796 = vmatprep.subr.mxu0 0.0
        %797 = vmatpush1.msra.mxu0 0.0
        %798 = vmatprep.subr.mxu0 0.0
        %799 = vmatpush1.msra.mxu0 %v763
        %800 = vmatprep.subr.mxu0 0.0
        %801 = vmatpush2.msra.mxu0 0.0
        %802 = vmatprep.subr.mxu0 0.0
        %803 = vmatpush2.msra.mxu0 0.0
        %804 = vmatprep.subr.mxu0 0.0
        %805 = vmatpush2.msra.mxu0 0.0
        %806 = vmatprep.subr.mxu0 0.0
        %807 = vmatpush2.msra.mxu0 0.0
        %808 = vmatprep.subr.mxu0 0.0
        %809 = vmatpush2.msra.mxu0 0.0
        %810 = vmatprep.subr.mxu0 0.0
        %811 = vmatpush2.msra.mxu0 0.0
        %812 = vmatprep.subr.mxu0 0.0
        %813 = vmatpush2.msra.mxu0 0.0
        %814 = vmatprep.subr.mxu0 0.0
        %815 = vmatpush2.msra.mxu0 0.0
        %816 = vmatprep.subr.mxu0 0.0
        %817 = vmatpush2.msra.mxu0 0.0
        %818 = vmatprep.subr.mxu0 0.0
        %819 = vmatpush2.msra.mxu0 0.0
        %820 = vmatprep.subr.mxu0 0.0
        %821 = vmatpush2.msra.mxu0 0.0
        %822 = vmatprep.subr.mxu0 0.0
        %823 = vmatpush2.msra.mxu0 0.0
        %824 = vmatprep.subr.mxu0 0.0
        %825 = vmatpush2.msra.mxu0 0.0
        %826 = vmatprep.subr.mxu0 0.0
        %827 = vmatpush2.msra.mxu0 0.0
        %828 = vmatprep.subr.mxu0 0.0
        %829 = vmatpush2.msra.mxu0 0.0
        %830 = vmatprep.subr.mxu0 0.0
        %831 = vmatpush2.msra.mxu0 0.0
        %832 = vmatprep.mubr.f32.mxu0 0.0
        %833 = vmatmul.mubr.f32.gmra.mxu0 %v766
        %v834 = vpop.f32.mrf.mxu0
        %v835 = vadd.f32 0.0, %v834
        %v836 = vpop.f32.mrf.mxu0
        %837 = vdwg.mxu0
        %838 = vrot.lane.b32.xlu0 %v334, 64
        %v839 = vpop.permute.xlu0 %838
        %v842 = vsel %vm339, %v684, 0
        %844 = vmatprep.subr.mxu0 0.0
        %845 = vmatpush1.msra.mxu0 0.0
        %846 = vmatprep.subr.mxu0 0.0
        %847 = vmatpush1.msra.mxu0 0.0
        %848 = vmatprep.subr.mxu0 0.0
        %849 = vmatpush1.msra.mxu0 0.0
        %850 = vmatprep.subr.mxu0 0.0
        %851 = vmatpush1.msra.mxu0 0.0
        %852 = vmatprep.subr.mxu0 0.0
        %853 = vmatpush1.msra.mxu0 0.0
        %854 = vmatprep.subr.mxu0 0.0
        %855 = vmatpush1.msra.mxu0 0.0
        %856 = vmatprep.subr.mxu0 0.0
        %857 = vmatpush1.msra.mxu0 0.0
        %858 = vmatprep.subr.mxu0 0.0
        %859 = vmatpush1.msra.mxu0 0.0
        %860 = vmatprep.subr.mxu0 0.0
        %861 = vmatpush1.msra.mxu0 0.0
        %862 = vmatprep.subr.mxu0 0.0
        %863 = vmatpush1.msra.mxu0 0.0
        %864 = vmatprep.subr.mxu0 0.0
        %865 = vmatpush1.msra.mxu0 0.0
        %866 = vmatprep.subr.mxu0 0.0
        %867 = vmatpush1.msra.mxu0 0.0
        %868 = vmatprep.subr.mxu0 0.0
        %869 = vmatpush1.msra.mxu0 0.0
        %870 = vmatprep.subr.mxu0 0.0
        %871 = vmatpush1.msra.mxu0 0.0
        %872 = vmatprep.subr.mxu0 0.0
        %873 = vmatpush1.msra.mxu0 0.0
        %874 = vmatprep.subr.mxu0 0.0
        %875 = vmatpush1.msra.mxu0 %v839
        %876 = vmatprep.subr.mxu0 0.0
        %877 = vmatpush2.msra.mxu0 0.0
        %878 = vmatprep.subr.mxu0 0.0
        %879 = vmatpush2.msra.mxu0 0.0
        %880 = vmatprep.subr.mxu0 0.0
        %881 = vmatpush2.msra.mxu0 0.0
        %882 = vmatprep.subr.mxu0 0.0
        %883 = vmatpush2.msra.mxu0 0.0
        %884 = vmatprep.subr.mxu0 0.0
        %885 = vmatpush2.msra.mxu0 0.0
        %886 = vmatprep.subr.mxu0 0.0
        %887 = vmatpush2.msra.mxu0 0.0
        %888 = vmatprep.subr.mxu0 0.0
        %889 = vmatpush2.msra.mxu0 0.0
        %890 = vmatprep.subr.mxu0 0.0
        %891 = vmatpush2.msra.mxu0 0.0
        %892 = vmatprep.subr.mxu0 0.0
        %893 = vmatpush2.msra.mxu0 0.0
        %894 = vmatprep.subr.mxu0 0.0
        %895 = vmatpush2.msra.mxu0 0.0
        %896 = vmatprep.subr.mxu0 0.0
        %897 = vmatpush2.msra.mxu0 0.0
        %898 = vmatprep.subr.mxu0 0.0
        %899 = vmatpush2.msra.mxu0 0.0
        %900 = vmatprep.subr.mxu0 0.0
        %901 = vmatpush2.msra.mxu0 0.0
        %902 = vmatprep.subr.mxu0 0.0
        %903 = vmatpush2.msra.mxu0 0.0
        %904 = vmatprep.subr.mxu0 0.0
        %905 = vmatpush2.msra.mxu0 0.0
        %906 = vmatprep.subr.mxu0 0.0
        %907 = vmatpush2.msra.mxu0 0.0
        %908 = vmatprep.mubr.f32.mxu0 0.0
        %909 = vmatmul.mubr.f32.gmra.mxu0 %v842
        %v910 = vpop.f32.mrf.mxu0
        %v911 = vadd.f32 0.0, %v910
        %v912 = vpop.f32.mrf.mxu0
        %913 = vdwg.mxu0
        %914 = vrot.lane.b32.xlu0 %v336, 64
        %v915 = vpop.permute.xlu0 %914
        %v918 = vsel %vm339, %v685, 0
        %920 = vmatprep.subr.mxu0 0.0
        %921 = vmatpush1.msra.mxu0 0.0
        %922 = vmatprep.subr.mxu0 0.0
        %923 = vmatpush1.msra.mxu0 0.0
        %924 = vmatprep.subr.mxu0 0.0
        %925 = vmatpush1.msra.mxu0 0.0
        %926 = vmatprep.subr.mxu0 0.0
        %927 = vmatpush1.msra.mxu0 0.0
        %928 = vmatprep.subr.mxu0 0.0
        %929 = vmatpush1.msra.mxu0 0.0
        %930 = vmatprep.subr.mxu0 0.0
        %931 = vmatpush1.msra.mxu0 0.0
        %932 = vmatprep.subr.mxu0 0.0
        %933 = vmatpush1.msra.mxu0 0.0
        %934 = vmatprep.subr.mxu0 0.0
        %935 = vmatpush1.msra.mxu0 0.0
        %936 = vmatprep.subr.mxu0 0.0
        %937 = vmatpush1.msra.mxu0 0.0
        %938 = vmatprep.subr.mxu0 0.0
        %939 = vmatpush1.msra.mxu0 0.0
        %940 = vmatprep.subr.mxu0 0.0
        %941 = vmatpush1.msra.mxu0 0.0
        %942 = vmatprep.subr.mxu0 0.0
        %943 = vmatpush1.msra.mxu0 0.0
        %944 = vmatprep.subr.mxu0 0.0
        %945 = vmatpush1.msra.mxu0 0.0
        %946 = vmatprep.subr.mxu0 0.0
        %947 = vmatpush1.msra.mxu0 0.0
        %948 = vmatprep.subr.mxu0 0.0
        %949 = vmatpush1.msra.mxu0 0.0
        %950 = vmatprep.subr.mxu0 0.0
        %951 = vmatpush1.msra.mxu0 %v915
        %952 = vmatprep.subr.mxu0 0.0
        %953 = vmatpush2.msra.mxu0 0.0
        %954 = vmatprep.subr.mxu0 0.0
        %955 = vmatpush2.msra.mxu0 0.0
        %956 = vmatprep.subr.mxu0 0.0
        %957 = vmatpush2.msra.mxu0 0.0
        %958 = vmatprep.subr.mxu0 0.0
        %959 = vmatpush2.msra.mxu0 0.0
        %960 = vmatprep.subr.mxu0 0.0
        %961 = vmatpush2.msra.mxu0 0.0
        %962 = vmatprep.subr.mxu0 0.0
        %963 = vmatpush2.msra.mxu0 0.0
        %964 = vmatprep.subr.mxu0 0.0
        %965 = vmatpush2.msra.mxu0 0.0
        %966 = vmatprep.subr.mxu0 0.0
        %967 = vmatpush2.msra.mxu0 0.0
        %968 = vmatprep.subr.mxu0 0.0
        %969 = vmatpush2.msra.mxu0 0.0
        %970 = vmatprep.subr.mxu0 0.0
        %971 = vmatpush2.msra.mxu0 0.0
        %972 = vmatprep.subr.mxu0 0.0
        %973 = vmatpush2.msra.mxu0 0.0
        %974 = vmatprep.subr.mxu0 0.0
        %975 = vmatpush2.msra.mxu0 0.0
        %976 = vmatprep.subr.mxu0 0.0
        %977 = vmatpush2.msra.mxu0 0.0
        %978 = vmatprep.subr.mxu0 0.0
        %979 = vmatpush2.msra.mxu0 0.0
        %980 = vmatprep.subr.mxu0 0.0
        %981 = vmatpush2.msra.mxu0 0.0
        %982 = vmatprep.subr.mxu0 0.0
        %983 = vmatpush2.msra.mxu0 0.0
        %984 = vmatprep.mubr.f32.mxu0 0.0
        %985 = vmatmul.mubr.f32.gmra.mxu0 %v918
        %v986 = vpop.f32.mrf.mxu0
        %v987 = vadd.f32 0.0, %v986
        %v988 = vpop.f32.mrf.mxu0
        %989 = vdwg.mxu0
        %991 = vrot.lane.b32.xlu0 %v835, 8
        %v992 = vpop.permute.xlu0 %991
        %995 = vrot.lane.b32.xlu0 %v911, 16
        %v996 = vpop.permute.xlu0 %995
        %999 = vrot.lane.b32.xlu0 %v987, 24
        %v1000 = vpop.permute.xlu0 %999
        %v1002 = vsel %vm339, %v759, %v992
        %vm1003 = vcmask 130048
        %v1004 = vsel %vm1003, %v1002, %v996
        %vm1005 = vcmask 195584
        %v1006 = vsel %vm1005, %v1004, %v1000
        %v1007 = vpack.c.bf16 %v1006, %v1006
        %v1008 = vld [vmem:[%s2] sm:$0xf]
        %v1009 = vld [vmem:[%s2 + $0x4] sm:$0xf]
        %v1010 = vld [vmem:[%s2 + $0x8] sm:$0xf]
        %v1011 = vld [vmem:[%s2 + $0xc] sm:$0xf]
        %v1012 = vlaneseq
        %v1013 = vshrl.u32 %v1012, 7
        %v1014 = vsub.s32 1, %v1013
        %v1015 = vrot.slane %v264, %v1014
        %v1020 = vunpack.c.l.b16 %v1008
        %v1021 = vunpack.c.l.b16 %v1009
        %v1022 = vunpack.c.l.b16 %v1010
        %v1023 = vunpack.c.l.b16 %v1011
        %v1024 = vpack.c.b16 %v1021, %v1020
        %v1025 = vpack.c.b16 %v1023, %v1022
        %v1029 = vsel %vm286, %v1007, 0
        %1031 = vmatprep.subr.bf16.mxu0 0
        %1032 = vmatpush1.bf16.msra.mxu0 0
        %1033 = vmatprep.subr.bf16.mxu0 0
        %1034 = vmatpush1.bf16.msra.mxu0 0
        %1035 = vmatprep.subr.bf16.mxu0 0
        %1036 = vmatpush1.bf16.msra.mxu0 0
        %1037 = vmatprep.subr.bf16.mxu0 0
        %1038 = vmatpush1.bf16.msra.mxu0 0
        %1039 = vmatprep.subr.bf16.mxu0 0
        %1040 = vmatpush1.bf16.msra.mxu0 0
        %1041 = vmatprep.subr.bf16.mxu0 0
        %1042 = vmatpush1.bf16.msra.mxu0 0
        %1043 = vmatprep.subr.bf16.mxu0 0
        %1044 = vmatpush1.bf16.msra.mxu0 %v1025
        %1045 = vmatprep.subr.bf16.mxu0 0
        %1046 = vmatpush1.bf16.msra.mxu0 %v1024
        %1047 = vmatprep.subr.bf16.mxu0 0
        %1048 = vmatpush2.bf16.msra.mxu0 0
        %1049 = vmatprep.subr.bf16.mxu0 0
        %1050 = vmatpush2.bf16.msra.mxu0 0
        %1051 = vmatprep.subr.bf16.mxu0 0
        %1052 = vmatpush2.bf16.msra.mxu0 0
        %1053 = vmatprep.subr.bf16.mxu0 0
        %1054 = vmatpush2.bf16.msra.mxu0 0
        %1055 = vmatprep.subr.bf16.mxu0 0
        %1056 = vmatpush2.bf16.msra.mxu0 0
        %1057 = vmatprep.subr.bf16.mxu0 0
        %1058 = vmatpush2.bf16.msra.mxu0 0
        %1059 = vmatprep.subr.bf16.mxu0 0
        %1060 = vmatpush2.bf16.msra.mxu0 0
        %1061 = vmatprep.subr.bf16.mxu0 0
        %1062 = vmatpush2.bf16.msra.mxu0 0
        %1063 = vmatprep.mubr.bf16.mxu0 0
        %1064 = vmatmul.mubr.bf16.gmra.mxu0 %v1029
        %v1065 = vpop.f32.mrf.mxu0
        %v1066 = vadd.f32 %v1015, %v1065
        %v1067 = vpop.f32.mrf.mxu0
        %v1068 = vpop.f32.mrf.mxu0
        %v1069 = vpop.f32.mrf.mxu0
        %1070 = vdwg.mxu0
        %v1071 = vadd.f32 %v1066, %v263
        %v1072 = vsel %vm286, %v1071, 0.0
        %1073 = vadd.xlane.f32.xlu0 %v1072
        %v1074 = vpop.xlane.xlu0 %1073
        %v1075 = vrcp.pop 32.0
        %v1076 = vmul.f32 %v1074, %v1075
        %v1077 = vsub.f32 %v1071, %v1076
        %v1078 = vmul.f32 %v1077, %v1077
        %v1079 = vsel %vm286, %v1078, 0.0
        %1080 = vadd.xlane.f32.xlu0 %v1079
        %v1081 = vpop.xlane.xlu0 %1080
        %v1082 = vmul.f32 %v1081, %v1075
        %v1083 = vadd.f32 %v1082, 1e-05
        %v1084 = vrsqrt.pop %v1083
        %v1085 = vmul.f32 %v1077, %v1084
        %v1086 = vlaneseq
        %v1087 = vshrl.u32 %v1086, 7
        %v1088 = vsub.s32 2, %v1087
        %v1089 = vrot.slane %v264, %v1088
        %v1090 = vmul.f32 %v1085, %v1089
        %v1091 = vlaneseq
        %v1092 = vshrl.u32 %v1091, 7
        %v1093 = vsub.s32 3, %v1092
        %v1094 = vrot.slane %v264, %v1093
        %v1095 = vadd.f32 %v1090, %v1094
        %v1096 = vpack.c.bf16 %v1095, %v1095
        %v1097 = vld [vmem:[#allocation2] sm:$0xf]
        %v1098 = vld [vmem:[#allocation2 + $0x4] sm:$0xf]
        %v1099 = vld [vmem:[#allocation2 + $0x8] sm:$0xf]
        %v1100 = vld [vmem:[#allocation2 + $0xc] sm:$0xf]
        %v1101 = vlaneseq
        %v1102 = vshrl.u32 %v1101, 7
        %v1103 = vsub.s32 7, %v1102
        %v1104 = vrot.slane %v264, %v1103
        %v1109 = vunpack.c.l.b16 %v1097
        %v1110 = vunpack.c.l.b16 %v1098
        %v1111 = vunpack.c.l.b16 %v1099
        %v1112 = vunpack.c.l.b16 %v1100
        %v1113 = vpack.c.b16 %v1110, %v1109
        %v1114 = vpack.c.b16 %v1112, %v1111
        %v1118 = vsel %vm286, %v1096, 0
        %1120 = vmatprep.subr.bf16.mxu0 0
        %1121 = vmatpush1.bf16.msra.mxu0 0
        %1122 = vmatprep.subr.bf16.mxu0 0
        %1123 = vmatpush1.bf16.msra.mxu0 0
        %1124 = vmatprep.subr.bf16.mxu0 0
        %1125 = vmatpush1.bf16.msra.mxu0 0
        %1126 = vmatprep.subr.bf16.mxu0 0
        %1127 = vmatpush1.bf16.msra.mxu0 0
        %1128 = vmatprep.subr.bf16.mxu0 0
        %1129 = vmatpush1.bf16.msra.mxu0 0
        %1130 = vmatprep.subr.bf16.mxu0 0
        %1131 = vmatpush1.bf16.msra.mxu0 0
        %1132 = vmatprep.subr.bf16.mxu0 0
        %1133 = vmatpush1.bf16.msra.mxu0 %v1114
        %1134 = vmatprep.subr.bf16.mxu0 0
        %1135 = vmatpush1.bf16.msra.mxu0 %v1113
        %1136 = vmatprep.subr.bf16.mxu0 0
        %1137 = vmatpush2.bf16.msra.mxu0 0
        %1138 = vmatprep.subr.bf16.mxu0 0
        %1139 = vmatpush2.bf16.msra.mxu0 0
        %1140 = vmatprep.subr.bf16.mxu0 0
        %1141 = vmatpush2.bf16.msra.mxu0 0
        %1142 = vmatprep.subr.bf16.mxu0 0
        %1143 = vmatpush2.bf16.msra.mxu0 0
        %1144 = vmatprep.subr.bf16.mxu0 0
        %1145 = vmatpush2.bf16.msra.mxu0 0
        %1146 = vmatprep.subr.bf16.mxu0 0
        %1147 = vmatpush2.bf16.msra.mxu0 0
        %1148 = vmatprep.subr.bf16.mxu0 0
        %1149 = vmatpush2.bf16.msra.mxu0 0
        %1150 = vmatprep.subr.bf16.mxu0 0
        %1151 = vmatpush2.bf16.msra.mxu0 0
        %1152 = vmatprep.mubr.bf16.mxu0 0
        %1153 = vmatmul.mubr.bf16.gmra.mxu0 %v1118
        %v1154 = vpop.f32.mrf.mxu0
        %v1155 = vadd.f32 %v1104, %v1154
        %v1156 = vpop.f32.mrf.mxu0
        %v1157 = vpop.f32.mrf.mxu0
        %v1158 = vpop.f32.mrf.mxu0
        %1159 = vdwg.mxu0
        %v1160 = vmax.f32 %v1155, 0.0
        %v1161 = vpack.c.bf16 %v1160, %v1160
        %v1162 = vld [vmem:[%s4] sm:$0xf]
        %v1163 = vld [vmem:[%s4 + $0x4] sm:$0xf]
        %v1164 = vld [vmem:[%s4 + $0x8] sm:$0xf]
        %v1165 = vld [vmem:[%s4 + $0xc] sm:$0xf]
        %v1166 = vld [vmem:[%s4 + $0x10] sm:$0xf]
        %v1167 = vld [vmem:[%s4 + $0x14] sm:$0xf]
        %v1168 = vld [vmem:[%s4 + $0x18] sm:$0xf]
        %v1169 = vld [vmem:[%s4 + $0x1c] sm:$0xf]
        %v1170 = vlaneseq
        %v1171 = vshrl.u32 %v1170, 7
        %v1172 = vsub.s32 6, %v1171
        %v1173 = vrot.slane %v264, %v1172
        %v1182 = vunpack.c.l.b16 %v1162
        %v1183 = vunpack.c.l.b16 %v1163
        %v1184 = vunpack.c.l.b16 %v1164
        %v1185 = vunpack.c.l.b16 %v1165
        %v1186 = vunpack.c.l.b16 %v1166
        %v1187 = vunpack.c.l.b16 %v1167
        %v1188 = vunpack.c.l.b16 %v1168
        %v1189 = vunpack.c.l.b16 %v1169
        %v1190 = vpack.c.b16 %v1183, %v1182
        %v1191 = vpack.c.b16 %v1185, %v1184
        %v1192 = vpack.c.b16 %v1187, %v1186
        %v1193 = vpack.c.b16 %v1189, %v1188
        %vm1198 = vcmask 523264
        %v1200 = vsel %vm1198, %v1161, 0
        %1202 = vmatprep.subr.bf16.mxu0 0
        %1203 = vmatpush1.bf16.msra.mxu0 0
        %1204 = vmatprep.subr.bf16.mxu0 0
        %1205 = vmatpush1.bf16.msra.mxu0 0
        %1206 = vmatprep.subr.bf16.mxu0 0
        %1207 = vmatpush1.bf16.msra.mxu0 0
        %1208 = vmatprep.subr.bf16.mxu0 0
        %1209 = vmatpush1.bf16.msra.mxu0 0
        %1210 = vmatprep.subr.bf16.mxu0 0
        %1211 = vmatpush1.bf16.msra.mxu0 %v1193
        %1212 = vmatprep.subr.bf16.mxu0 0
        %1213 = vmatpush1.bf16.msra.mxu0 %v1192
        %1214 = vmatprep.subr.bf16.mxu0 0
        %1215 = vmatpush1.bf16.msra.mxu0 %v1191
        %1216 = vmatprep.subr.bf16.mxu0 0
        %1217 = vmatpush1.bf16.msra.mxu0 %v1190
        %1218 = vmatprep.subr.bf16.mxu0 0
        %1219 = vmatpush2.bf16.msra.mxu0 0
        %1220 = vmatprep.subr.bf16.mxu0 0
        %1221 = vmatpush2.bf16.msra.mxu0 0
        %1222 = vmatprep.subr.bf16.mxu0 0
        %1223 = vmatpush2.bf16.msra.mxu0 0
        %1224 = vmatprep.subr.bf16.mxu0 0
        %1225 = vmatpush2.bf16.msra.mxu0 0
        %1226 = vmatprep.subr.bf16.mxu0 0
        %1227 = vmatpush2.bf16.msra.mxu0 0
        %1228 = vmatprep.subr.bf16.mxu0 0
        %1229 = vmatpush2.bf16.msra.mxu0 0
        %1230 = vmatprep.subr.bf16.mxu0 0
        %1231 = vmatpush2.bf16.msra.mxu0 0
        %1232 = vmatprep.subr.bf16.mxu0 0
        %1233 = vmatpush2.bf16.msra.mxu0 0
        %1234 = vmatprep.mubr.bf16.mxu0 0
        %1235 = vmatmul.mubr.bf16.gmra.mxu0 %v1200
        %v1236 = vpop.f32.mrf.mxu0
        %v1237 = vadd.f32 %v1173, %v1236
        %v1238 = vpop.f32.mrf.mxu0
        %v1239 = vpop.f32.mrf.mxu0
        %v1240 = vpop.f32.mrf.mxu0
        %1241 = vdwg.mxu0
        %v1242 = vadd.f32 %v1095, %v1237
        %v1243 = vsel %vm286, %v1242, 0.0
        %1244 = vadd.xlane.f32.xlu0 %v1243
        %v1245 = vpop.xlane.xlu0 %1244
        %v1246 = vmul.f32 %v1245, %v1075
        %v1247 = vsub.f32 %v1242, %v1246
        %v1248 = vmul.f32 %v1247, %v1247
        %v1249 = vsel %vm286, %v1248, 0.0
        %1250 = vadd.xlane.f32.xlu0 %v1249
        %v1251 = vpop.xlane.xlu0 %1250
        %v1252 = vmul.f32 %v1251, %v1075
        %v1253 = vadd.f32 %v1252, 1e-05
        %v1254 = vrsqrt.pop %v1253
        %v1255 = vmul.f32 %v1247, %v1254
        %v1256 = vlaneseq
        %v1257 = vshrl.u32 %v1256, 7
        %v1258 = vsub.s32 4, %v1257
        %v1259 = vrot.slane %v264, %v1258
        %v1260 = vmul.f32 %v1255, %v1259
        %v1261 = vlaneseq
        %v1262 = vshrl.u32 %v1261, 7
        %v1263 = vsub.s32 5, %v1262
        %v1264 = vrot.slane %v264, %v1263
        %v1265 = vadd.f32 %v1260, %v1264
        %1266 = vst.msk [vmem:[%s257] sm:$0xff] %vm286, %v1265
        %s1267 = sand.u32 %s160, 1
        %s1268 = scalar_lea.sflag [#allocation4], %s1267
        %s1269 = sand.u32 %s160, 1
        %s1270 = smul.addr %s1269, 8
        %s1271 = scalar_lea.vmem [#allocation5], %s1270
        // Predicated region
        $region49: #{tpu_custom_call.1} parent=43 // pred_check
          %p1272 = pneg %p170
        $region50: #{tpu_custom_call.1} parent=43 // pred_check_branch
          %1274 = sbr.rel (%p1272) target = $region52
        $region51: #{tpu_custom_call.1} parent=43 // pred_region
          %s1276 = ssub.s32 128, 128
          %1277 = vsyncadd %s1268, %s1276
          %s1278 = smul.addr %s21, 128
          %s1279 = scalar_lea.hbm %s6, %s1278
          %s1281 = sshll.u32 %s1271, 4
          %s1282 = int_to_ptr.vmem [resolvable:$true] %s1281
          %1284 = dma.vmem_to_hbm [thread:$0]  %s1282, 128, %s1279, %s1268
        $region52: #{tpu_custom_call.1} parent=43 // pred_fallthru
          _
      $region44: #{tpu_custom_call.1} parent=5 // pred_fallthru
        _
      %p1285 = scmp.le.s32.totalorder 2, %s16
      // Predicated region
      $region53: #{tpu_custom_call.1} parent=5 // pred_check
        %p1286 = pneg %p1285
      $region54: #{tpu_custom_call.1} parent=5 // pred_check_branch
        %1288 = sbr.rel (%p1286) target = $region56
      $region55: #{tpu_custom_call.1} parent=5 // pred_region
        %s1289 = ssub.s32 %s16, 2
        // Predicated region
        $region57: #{tpu_custom_call.1} parent=55 // pred_check
          %p1290 = pneg %p176
        $region58: #{tpu_custom_call.1} parent=55 // pred_check_branch
          %1292 = sbr.rel (%p1290) target = $region60
        $region59: #{tpu_custom_call.1} parent=55 // pred_region
          %s1293 = sand.u32 %s161, 1
          %s1294 = scalar_lea.sflag [#allocation4], %s1293
          %s1295 = sand.u32 %s161, 1
          %s1296 = smul.addr %s1295, 8
          %s1297 = scalar_lea.vmem [#allocation5], %s1296
          %1298 = dma.done %s1294, 128
        $region60: #{tpu_custom_call.1} parent=55 // pred_fallthru
          _
      $region56: #{tpu_custom_call.1} parent=5 // pred_fallthru
        _
    $region6: #{tpu_custom_call.1} parent=1 // loop_footer
      %s20 = sadd.s32 1, %s16
    $region7: #{tpu_custom_call.1} parent=1 // loop_footer_branch
      %15 = sbr.rel target = $region3
    $region8: #{tpu_custom_call.1} parent=1 // loop_exit
      _
    %1299 = vsyncpa [#allocation3], 1
    %s1300 = scalar_lea.sflag [#allocation3], 1
    %1301 = vsyncpa %s1300, 1
    %1302 = vsyncpa [#allocation4], 1
    %s1303 = scalar_lea.sflag [#allocation4], 1
    %1304 = vsyncpa %s1303, 1

</llo_original>
